<compile_context>
chip_gen: v6e
topology: v6e:2x2x1
jax: 0.10.0
libtpu: 0.0.40
codegen_flags: <defaults>
</compile_context>

<pallas_src>
import functools

import jax
import jax.numpy as jnp
from jax.experimental import pallas as pl
from jax.experimental.pallas import tpu as pltpu

LANE = 128   # lane width
SUB = 8      # sublane multiple


def _round_up(x, m):
    return (x + m - 1) // m * m


def _pick_tile(n, cap, mult):
    """Largest t <= cap with t % mult == 0 and n % t == 0 (None if none)."""
    cap = min(cap, n)
    best = None
    t = mult
    while t <= cap:
        if n % t == 0:
            best = t
        t += mult
    return best


def _vmem_limit_bytes(estimate):
    """Clamp a per-call VMEM request to ~90% of physical capacity."""
    cap = 64 * 1024 * 1024          # conservative fallback (v7x per-TC VMEM)
    try:
        cap = pltpu.get_tpu_info().vmem_capacity_bytes
    except Exception:
        pass
    return int(min(max(int(estimate), 32 * 1024 * 1024), int(cap * 0.9)))


# ----------------------------------------------------------------------------
# Kernel 1: K-tiled matmul + folded BN (+ optional ReLU)
# ----------------------------------------------------------------------------
def _mm_bn_act_kernel(x_ref, w_ref, s_ref, b_ref, o_ref, acc_ref, *, relu):
    @pl.when(pl.program_id(1) == 0)
    def _init():
        acc_ref[...] = jnp.zeros_like(acc_ref)

    acc_ref[...] += jnp.dot(x_ref[...], w_ref[...],
                            preferred_element_type=jnp.float32)

    @pl.when(pl.program_id(1) == pl.num_programs(1) - 1)
    def _finalize():
        y = acc_ref[...] * s_ref[...] + b_ref[...]
        if relu:
            y = jnp.maximum(y, 0.0)
        o_ref[...] = y.astype(o_ref.dtype)


def matmul_bn_act(x, w, scale, bias, *, relu=True, out_dtype=jnp.bfloat16,
                  tm_cap=1024, tk_cap=512):
    """(x @ w) * scale + bias (+ ReLU).  x: (M, K) bf16, w: (K, C) bf16."""
    M, K = x.shape
    K2, C = w.shape
    assert K == K2 and C % LANE == 0 and K % LANE == 0

    # Row tiling: prefer a divisor of M (up to tm_cap); otherwise pad rows.
    tm = _pick_tile(M, min(tm_cap, M), SUB)
    Mp = M
    if tm is None:
        tm = min(tm_cap, 256)
        Mp = _round_up(M, tm)
        x = jnp.pad(x, ((0, Mp - M), (0, 0)))
    tk = _pick_tile(K, tk_cap, LANE)  # K is always a multiple of 128

    s2 = scale.reshape(1, C).astype(jnp.float32)
    b2 = bias.reshape(1, C).astype(jnp.float32)

    out = pl.pallas_call(
        functools.partial(_mm_bn_act_kernel, relu=relu),
        out_shape=jax.ShapeDtypeStruct((Mp, C), out_dtype),
        grid=(Mp // tm, K // tk),
        in_specs=[
            pl.BlockSpec((tm, tk), lambda m, k: (m, k)),
            pl.BlockSpec((tk, C), lambda m, k: (k, 0)),
            pl.BlockSpec((1, C), lambda m, k: (0, 0)),
            pl.BlockSpec((1, C), lambda m, k: (0, 0)),
        ],
        out_specs=pl.BlockSpec((tm, C), lambda m, k: (m, 0)),
        scratch_shapes=[pltpu.VMEM((tm, C), jnp.float32)],
        compiler_params=pltpu.CompilerParams(
            dimension_semantics=("parallel", "arbitrary")),
    )(x, w, s2, b2)
    if Mp != M:
        out = out[:M]
    return out


# ----------------------------------------------------------------------------
# Kernel 2: fused dilated 3x3 convs (b2/b3/b4) + BN + ReLU, Cin-tiled
# ----------------------------------------------------------------------------
def _dilated3_kernel(x_ref, w_ref, s_ref, b_ref,
                     o0_ref, o1_ref, o2_ref,
                     a0_ref, a1_ref, a2_ref,
                     *, dils, dmax, H, W):
    c_step = pl.program_id(1)
    accs = (a0_ref, a1_ref, a2_ref)
    outs = (o0_ref, o1_ref, o2_ref)

    @pl.when(c_step == 0)
    def _init():
        for a in accs:
            a[...] = jnp.zeros_like(a)

    tc = x_ref.shape[-1]
    for bi, d in enumerate(dils):
        base = dmax - d
        for kh in range(3):
            r0 = base + kh * d
            for kw in range(3):
                c0 = base + kw * d
                # TODO(synk): c0 is generally not 8-aligned -> unaligned
                # sublane slice (extra XLU relayout per tap).
                xs = x_ref[pl.ds(r0, H), pl.ds(c0, W), :].reshape(H * W, tc)
                accs[bi][...] += jnp.dot(xs, w_ref[bi, kh * 3 + kw],
                                         preferred_element_type=jnp.float32)

    @pl.when(c_step == pl.num_programs(1) - 1)
    def _finalize():
        for bi in range(3):
            y = accs[bi][...] * s_ref[bi] + b_ref[bi]
            outs[bi][...] = jnp.maximum(y, 0.0).astype(outs[bi].dtype)


def dilated_conv3x3_bn_relu_fused(xpad, w_all, s_all, b_all, *, dils, dmax,
                                  H, W, out_dtype=jnp.bfloat16, tc_cap=512):
    """Fused b2/b3/b4.

    xpad : (N, H+2*dmax, W+2*dmax, Cin_p) bf16 (shared across dilations)
    w_all: (3, 9, Cin_p, Co_p) bf16        (stacked per-branch tap weights)
    s_all, b_all: (3, 1, Co_p) f32          (folded BN scale / bias)
    Returns three (N, H*W, Co_p) arrays.
    """
    assert len(dils) == 3
    N, Hpd, Wpd, Cin_p = xpad.shape
    _, _, _, Co_p = w_all.shape
    tc = _pick_tile(Cin_p, tc_cap, LANE)   # Cin_p is a multiple of 128
    n_c = Cin_p // tc
    HW = H * W

    est = (2 * Hpd * Wpd * tc * 2            # padded-image slab, 2 buffers, bf16
           + 2 * 3 * 9 * tc * Co_p * 2       # stacked weight tile, 2 buffers
           + 3 * HW * Co_p * 4               # f32 accumulators
           + 2 * 3 * HW * Co_p * 2           # output blocks, 2 buffers
           + 4 * 3 * Co_p * 4)               # scale / bias

    out_shape = tuple(jax.ShapeDtypeStruct((N, HW, Co_p), out_dtype)
                      for _ in range(3))
    out_spec = pl.BlockSpec((None, HW, Co_p), lambda n, c: (n, 0, 0))

    return pl.pallas_call(
        functools.partial(_dilated3_kernel, dils=tuple(dils), dmax=dmax,
                          H=H, W=W),
        out_shape=out_shape,
        grid=(N, n_c),
        in_specs=[
            # Whole padded image of one batch item, one Cin tile per step;
            # the same block is reused for all 27 tap matmuls (single DMA).
            pl.BlockSpec((None, Hpd, Wpd, tc), lambda n, c: (n, 0, 0, c)),
            # Stacked 3x9 weights for the current Cin tile.
            pl.BlockSpec((3, 9, tc, Co_p), lambda n, c: (0, 0, c, 0)),
            pl.BlockSpec((3, 1, Co_p), lambda n, c: (0, 0, 0)),
            pl.BlockSpec((3, 1, Co_p), lambda n, c: (0, 0, 0)),
        ],
        out_specs=(out_spec, out_spec, out_spec),
        scratch_shapes=[pltpu.VMEM((HW, Co_p), jnp.float32)] * 3,
        compiler_params=pltpu.CompilerParams(
            dimension_semantics=("parallel", "arbitrary"),
            vmem_limit_bytes=_vmem_limit_bytes(est)),
    )(xpad, w_all, s_all, b_all)


# ----------------------------------------------------------------------------
# Kernel 3: tiled global average pool (channels-last input)
# ----------------------------------------------------------------------------
def _avgpool_kernel(x_ref, o_ref, acc_ref, *, inv_hw):
    @pl.when(pl.program_id(1) == 0)
    def _init():
        acc_ref[...] = jnp.zeros_like(acc_ref)

    acc_ref[...] += jnp.sum(x_ref[...].astype(jnp.float32), axis=0,
                            keepdims=True)

    @pl.when(pl.program_id(1) == pl.num_programs(1) - 1)
    def _finalize():
        o_ref[...] = acc_ref[...] * inv_hw


def global_avg_pool(x_cl, H, W):
    """x_cl: (N, H, W, Cin_p) bf16 channels-last  ->  (N, Cin_p) f32."""
    N, _, _, Cp = x_cl.shape
    HW = H * W
    x3 = x_cl.reshape(N, HW, Cp)
    tk = _pick_tile(HW, 2048, SUB)
    HWp = HW
    if tk is None:
        tk = 256
        HWp = _round_up(HW, tk)
        x3 = jnp.pad(x3, ((0, 0), (0, HWp - HW), (0, 0)))  # zeros: sum unaffected

    out = pl.pallas_call(
        functools.partial(_avgpool_kernel, inv_hw=1.0 / HW),
        out_shape=jax.ShapeDtypeStruct((N, 1, Cp), jnp.float32),
        grid=(N, HWp // tk),
        in_specs=[pl.BlockSpec((None, tk, Cp), lambda n, k: (n, k, 0))],
        out_specs=pl.BlockSpec((None, 1, Cp), lambda n, k: (n, 0, 0)),
        scratch_shapes=[pltpu.VMEM((1, Cp), jnp.float32)],
        compiler_params=pltpu.CompilerParams(
            dimension_semantics=("parallel", "arbitrary")),
    )(x3)
    return out.reshape(N, Cp)


# ----------------------------------------------------------------------------
# Kernel 4: fused projection (concat-free 1x1 conv over the 5 branches)
# ----------------------------------------------------------------------------
def _proj_kernel(x1_ref, x2_ref, x3_ref, x4_ref,
                 w1_ref, w2_ref, w3_ref, w4_ref,
                 x5_ref, s_ref, b_ref, o_ref):
    acc = jnp.dot(x1_ref[...], w1_ref[...], preferred_element_type=jnp.float32)
    acc = acc + jnp.dot(x2_ref[...], w2_ref[...], preferred_element_type=jnp.float32)
    acc = acc + jnp.dot(x3_ref[...], w3_ref[...], preferred_element_type=jnp.float32)
    acc = acc + jnp.dot(x4_ref[...], w4_ref[...], preferred_element_type=jnp.float32)
    y = (acc + x5_ref[...]) * s_ref[...] + b_ref[...]   # pooled term is pre-BN
    o_ref[...] = jnp.maximum(y, 0.0).astype(o_ref.dtype)


def fused_projection(branches, wsplit, x5term, scale, bias,
                     *, out_dtype=jnp.float32, tm_cap=1024):
    """branches: 4 x (N, HW, Co_p) bf16; wsplit: 4 x (Co_p, Co_p) bf16;
       x5term: (N, 1, Co_p) f32 (pooled branch already times its proj slice)."""
    N, HW, Co = branches[0].shape
    tm = _pick_tile(HW, tm_cap, SUB)
    HWp = HW
    if tm is None:
        tm = 256
        HWp = _round_up(HW, tm)
        branches = [jnp.pad(b, ((0, 0), (0, HWp - HW), (0, 0))) for b in branches]

    s2 = scale.reshape(1, Co).astype(jnp.float32)
    b2 = bias.reshape(1, Co).astype(jnp.float32)

    bspec = pl.BlockSpec((None, tm, Co), lambda n, m: (n, m, 0))
    wspec = pl.BlockSpec((Co, Co), lambda n, m: (0, 0))
    vspec = pl.BlockSpec((None, 1, Co), lambda n, m: (n, 0, 0))
    sspec = pl.BlockSpec((1, Co), lambda n, m: (0, 0))

    out = pl.pallas_call(
        _proj_kernel,
        out_shape=jax.ShapeDtypeStruct((N, HWp, Co), out_dtype),
        grid=(N, HWp // tm),
        in_specs=[bspec] * 4 + [wspec] * 4 + [vspec, sspec, sspec],
        out_specs=pl.BlockSpec((None, tm, Co), lambda n, m: (n, m, 0)),
        compiler_params=pltpu.CompilerParams(
            dimension_semantics=("parallel", "parallel")),
    )(*branches, *wsplit, x5term, s2, b2)
    if HWp != HW:
        out = out[:, :HW]
    return out


# ----------------------------------------------------------------------------
# Parameters (synthetic, deterministic; BN folded into scale/bias)
# ----------------------------------------------------------------------------
def init_params(key, dim_in, dim_out, eps=1e-5):
    def branch(k, cin, cout, ksize):
        k1, k2, k3, k4, k5, k6 = jax.random.split(k, 6)
        w = jax.random.normal(k1, (cout, cin, ksize, ksize), jnp.float32) * 0.1
        conv_b = jax.random.normal(k2, (cout,), jnp.float32) * 0.1
        gamma = jax.random.uniform(k3, (cout,), jnp.float32, 0.5, 1.5)
        beta = jax.random.normal(k4, (cout,), jnp.float32) * 0.1
        r_mean = jax.random.normal(k5, (cout,), jnp.float32) * 0.1
        r_var = jax.random.uniform(k6, (cout,), jnp.float32, 0.5, 1.5)
        scale = gamma / jnp.sqrt(r_var + eps)
        bias = beta - r_mean * scale + scale * conv_b   # fold conv bias + BN shift
        return {"w": w, "scale": scale, "bias": bias}

    ks = jax.random.split(key, 6)
    return {
        "b1": branch(ks[0], dim_in, dim_out, 1),
        "b2": branch(ks[1], dim_in, dim_out, 3),
        "b3": branch(ks[2], dim_in, dim_out, 3),
        "b4": branch(ks[3], dim_in, dim_out, 3),
        "b5": branch(ks[4], dim_in, dim_out, 1),
        "proj": branch(ks[5], dim_out * 5, dim_out, 1),
    }


def prepare_params(params, dim_in, dim_out):
    """One-time weight prep: transpose, pad channels to 128 lanes, cast to bf16."""
    Cin_p = _round_up(dim_in, LANE)
    Co_p = _round_up(dim_out, LANE)

    def pad_vec(v):
        return jnp.pad(v.astype(jnp.float32), (0, Co_p - v.shape[0]))

    def prep_1x1(br):
        w = br["w"].reshape(dim_out, dim_in)                      # (Cout, Cin)
        w = jnp.pad(w, ((0, Co_p - dim_out), (0, Cin_p - dim_in)))
        w = jnp.transpose(w).astype(jnp.bfloat16)                 # (Cin_p, Co_p)
        return {"w": w, "scale": pad_vec(br["scale"]), "bias": pad_vec(br["bias"])}

    def prep_3x3_w(br):
        w = jnp.transpose(br["w"], (2, 3, 1, 0))                  # (3,3,Cin,Cout)
        w = jnp.pad(w, ((0, 0), (0, 0), (0, Cin_p - dim_in), (0, Co_p - dim_out)))
        return w.reshape(9, Cin_p, Co_p).astype(jnp.bfloat16)     # tap = kh*3+kw

    dil_keys = ("b2", "b3", "b4")
    dil_w = jnp.stack([prep_3x3_w(params[k]) for k in dil_keys])  # (3,9,Cin_p,Co_p)
    dil_s = jnp.stack([pad_vec(params[k]["scale"]) for k in dil_keys]).reshape(3, 1, Co_p)
    dil_b = jnp.stack([pad_vec(params[k]["bias"]) for k in dil_keys]).reshape(3, 1, Co_p)

    prepped = {
        "b1": prep_1x1(params["b1"]),
        "dil": {"w": dil_w, "scale": dil_s, "bias": dil_b},
        "b5": prep_1x1(params["b5"]),
    }
    # projection weight: (Cout, 5*Cout, 1, 1) -> 5 slices of (Co_p, Co_p)
    wp = params["proj"]["w"].reshape(dim_out, 5 * dim_out)
    wsplit = []
    for i in range(5):
        wi = jnp.transpose(wp[:, i * dim_out:(i + 1) * dim_out])  # (Cout_in, Cout)
        wi = jnp.pad(wi, ((0, Co_p - dim_out), (0, Co_p - dim_out)))
        wsplit.append(wi.astype(jnp.bfloat16))
    prepped["proj"] = {"w": wsplit,
                       "scale": pad_vec(params["proj"]["scale"]),
                       "bias": pad_vec(params["proj"]["bias"])}
    prepped["dims"] = (dim_in, dim_out, Cin_p, Co_p)
    return prepped


# ----------------------------------------------------------------------------
# ASPP forward
# ----------------------------------------------------------------------------
def aspp_forward(x_nchw, p, dilations=(1, 6, 12, 18)):
    N, Cin, H, W = x_nchw.shape
    dim_in, dim_out, Cin_p, Co_p = p["dims"]
    assert Cin == dim_in
    HW = H * W
    dils = tuple(dilations[1:])
    dmax = max(dils)

    # channels-last, lane-padded, bf16 activations (MXU operands)
    x_cl = jnp.transpose(x_nchw, (0, 2, 3, 1))
    x_cl = jnp.pad(x_cl, ((0, 0), (0, 0), (0, 0), (0, Cin_p - Cin)))
    x_cl = x_cl.astype(jnp.bfloat16)
    x_flat = x_cl.reshape(N * HW, Cin_p)

    # b1: 1x1 conv + BN + ReLU
    x1 = matmul_bn_act(x_flat, p["b1"]["w"], p["b1"]["scale"], p["b1"]["bias"],
                       relu=True, out_dtype=jnp.bfloat16)
    branch_outs = [x1.reshape(N, HW, Co_p)]

    # b2..b4: single fused pallas_call over all three dilations
    # (shared dmax-padded input read ~once total).
    xpad = jnp.pad(x_cl, ((0, 0), (dmax, dmax), (dmax, dmax), (0, 0)))
    y2, y3, y4 = dilated_conv3x3_bn_relu_fused(
        xpad, p["dil"]["w"], p["dil"]["scale"], p["dil"]["bias"],
        dils=dils, dmax=dmax, H=H, W=W)
    branch_outs += [y2, y3, y4]

    # b5: global avg pool -> 1x1 conv + BN + ReLU.  The tiny (N-row) matmuls
    # run as plain jnp.dot in the wrapper; the 1x1 -> HxW bilinear upsample
    # (align_corners=False) of a 1x1 source is an exact broadcast, folded into
    # the projection as a per-batch additive pre-BN term x5 @ Wp5.
    pooled = global_avg_pool(x_cl, H, W)                          # (N, Cin_p) f32
    x5 = jnp.dot(pooled, p["b5"]["w"].astype(jnp.float32))
    x5 = jnp.maximum(x5 * p["b5"]["scale"] + p["b5"]["bias"], 0.0)
    x5term = jnp.dot(x5, p["proj"]["w"][4].astype(jnp.float32))   # (N, Co_p)
    x5term = x5term.reshape(N, 1, Co_p)

    # fused projection (no concat, no broadcast of the pooled branch)
    out = fused_projection(branch_outs, p["proj"]["w"][:4], x5term,
                           p["proj"]["scale"], p["proj"]["bias"])
    out = out[:, :, :dim_out].reshape(N, H, W, dim_out)
    return jnp.transpose(out, (0, 3, 1, 2)).astype(jnp.float32)   # NCHW


if __name__ == "__main__":
    key = jax.random.PRNGKey(0)
    kx, kp = jax.random.split(key)

    N, dim_in, H, W = 2, 4, 16, 16
    dim_out = 8

    x = jax.random.normal(kx, (N, dim_in, H, W), jnp.float32)
    raw_params = init_params(kp, dim_in, dim_out)
    params = prepare_params(raw_params, dim_in, dim_out)

    out = aspp_forward(x, params)
    out = jax.block_until_ready(out)
    assert out.shape == (N, dim_out, H, W), out.shape
    assert bool(jnp.all(jnp.isfinite(out)))
    print("KERNEL_OK")
</pallas_src>

<mosaic_0001>
module attributes {stable_mosaic.version = 11 : i64} {
  func.func @_mm_bn_act_kernel(%arg0: i32, %arg1: i32, %arg2: memref<512x128xbf16, #tpu.memory_space<vmem>>, %arg3: memref<128x128xbf16, #tpu.memory_space<vmem>>, %arg4: memref<1x128xf32, #tpu.memory_space<vmem>>, %arg5: memref<1x128xf32, #tpu.memory_space<vmem>>, %arg6: memref<512x128xbf16, #tpu.memory_space<vmem>>, %arg7: memref<512x128xf32, #tpu.memory_space<vmem>>) attributes {dimension_semantics = [#tpu.dimension_semantics<parallel>, #tpu.dimension_semantics<arbitrary>], iteration_bounds = array<i64: 1, 1>, scalar_prefetch = 0 : i64, scratch_operands = 1 : i64, tpu.core_type = #tpu.core_type<tc>, window_params = [{transform_indices = @transform_0, window_bounds = array<i64: 512, 128>}, {transform_indices = @transform_1, window_bounds = array<i64: 128, 128>}, {pipeline_mode = #tpu.pipeline_mode<synchronous>, transform_indices = @transform_2, window_bounds = array<i64: 1, 128>}, {pipeline_mode = #tpu.pipeline_mode<synchronous>, transform_indices = @transform_3, window_bounds = array<i64: 1, 128>}, {transform_indices = @transform_4, window_bounds = array<i64: 512, 128>}]} {
    %c0_i32 = arith.constant 0 : i32
    %0 = arith.cmpi eq, %arg1, %c0_i32 : i32
    %1 = arith.extui %0 : i1 to i32
    %c0_i32_0 = arith.constant 0 : i32
    %2 = arith.cmpi ne, %1, %c0_i32_0 : i32
    scf.if %2 {
      %cst_10 = arith.constant 0.000000e+00 : f32
      %12 = vector.broadcast %cst_10 : f32 to vector<512x128xf32>
      %c0_11 = arith.constant 0 : index
      %c0_12 = arith.constant 0 : index
      %13 = vector.load %arg7[%c0_11, %c0_12] : memref<512x128xf32, #tpu.memory_space<vmem>>, vector<512x128xf32>
      tpu.vector_store %arg7[%c0_11, %c0_12], %12 {strides = array<i32>} : memref<512x128xf32, #tpu.memory_space<vmem>>, vector<512x128xf32>,
    } else {
    }
    %c0 = arith.constant 0 : index
    %c0_1 = arith.constant 0 : index
    %3 = vector.load %arg7[%c0, %c0_1] : memref<512x128xf32, #tpu.memory_space<vmem>>, vector<512x128xf32>
    %c0_2 = arith.constant 0 : index
    %c0_3 = arith.constant 0 : index
    %4 = vector.load %arg2[%c0_2, %c0_3] : memref<512x128xbf16, #tpu.memory_space<vmem>>, vector<512x128xbf16>
    %c0_4 = arith.constant 0 : index
    %c0_5 = arith.constant 0 : index
    %5 = vector.load %arg3[%c0_4, %c0_5] : memref<128x128xbf16, #tpu.memory_space<vmem>>, vector<128x128xbf16>
    %cst = arith.constant dense<0.000000e+00> : vector<512x128xf32>
    %6 = tpu.matmul %4, %5, %cst {dimension_numbers = #tpu.dot_dimension_numbers<[1], [0], [0], [1], [0, 0, 1, 1], [], []>} : vector<512x128xbf16>, vector<128x128xbf16>, vector<512x128xf32> -> vector<512x128xf32>
    %7 = arith.addf %3, %6 : vector<512x128xf32>
    %c0_6 = arith.constant 0 : index
    %c0_7 = arith.constant 0 : index
    %8 = vector.load %arg7[%c0_6, %c0_7] : memref<512x128xf32, #tpu.memory_space<vmem>>, vector<512x128xf32>
    tpu.vector_store %arg7[%c0_6, %c0_7], %7 {strides = array<i32>} : memref<512x128xf32, #tpu.memory_space<vmem>>, vector<512x128xf32>,
    %c0_i32_8 = arith.constant 0 : i32
    %9 = arith.cmpi eq, %arg1, %c0_i32_8 : i32
    %10 = arith.extui %9 : i1 to i32
    %c0_i32_9 = arith.constant 0 : i32
    %11 = arith.cmpi ne, %10, %c0_i32_9 : i32
    scf.if %11 {
      %c0_10 = arith.constant 0 : index
      %c0_11 = arith.constant 0 : index
      %12 = vector.load %arg7[%c0_10, %c0_11] : memref<512x128xf32, #tpu.memory_space<vmem>>, vector<512x128xf32>
      %c0_12 = arith.constant 0 : index
      %c0_13 = arith.constant 0 : index
      %13 = vector.load %arg4[%c0_12, %c0_13] : memref<1x128xf32, #tpu.memory_space<vmem>>, vector<1x128xf32>
      %14 = vector.broadcast %13 : vector<1x128xf32> to vector<512x128xf32>
      %15 = arith.mulf %12, %14 : vector<512x128xf32>
      %c0_14 = arith.constant 0 : index
      %c0_15 = arith.constant 0 : index
      %16 = vector.load %arg5[%c0_14, %c0_15] : memref<1x128xf32, #tpu.memory_space<vmem>>, vector<1x128xf32>
      %17 = vector.broadcast %16 : vector<1x128xf32> to vector<512x128xf32>
      %18 = arith.addf %15, %17 : vector<512x128xf32>
      %cst_16 = arith.constant 0.000000e+00 : f32
      %19 = vector.broadcast %cst_16 : f32 to vector<512x128xf32>
      %20 = arith.maximumf %18, %19 : vector<512x128xf32>
      %21 = arith.truncf %20 : vector<512x128xf32> to vector<512x128xbf16>
      %c0_17 = arith.constant 0 : index
      %c0_18 = arith.constant 0 : index
      %22 = vector.load %arg6[%c0_17, %c0_18] : memref<512x128xbf16, #tpu.memory_space<vmem>>, vector<512x128xbf16>
      tpu.vector_store %arg6[%c0_17, %c0_18], %21 {strides = array<i32>} : memref<512x128xbf16, #tpu.memory_space<vmem>>, vector<512x128xbf16>,
    } else {
    }
    return
  }
  func.func @transform_0(%arg0: i32, %arg1: i32) -> (i32, i32) {
    %c0_i32 = arith.constant 0 : i32
    return %arg0, %arg1 : i32, i32
  }
  func.func @transform_1(%arg0: i32, %arg1: i32) -> (i32, i32) {
    %c0_i32 = arith.constant 0 : i32
    %c0_i32_0 = arith.constant 0 : i32
    return %arg1, %c0_i32 : i32, i32
  }
  func.func @transform_2(%arg0: i32, %arg1: i32) -> (i32, i32) {
    %c0_i32 = arith.constant 0 : i32
    %c0_i32_0 = arith.constant 0 : i32
    %c0_i32_1 = arith.constant 0 : i32
    return %c0_i32, %c0_i32_0 : i32, i32
  }
  func.func @transform_3(%arg0: i32, %arg1: i32) -> (i32, i32) {
    %c0_i32 = arith.constant 0 : i32
    %c0_i32_0 = arith.constant 0 : i32
    %c0_i32_1 = arith.constant 0 : i32
    return %c0_i32, %c0_i32_0 : i32, i32
  }
  func.func @transform_4(%arg0: i32, %arg1: i32) -> (i32, i32) {
    %c0_i32 = arith.constant 0 : i32
    %c0_i32_0 = arith.constant 0 : i32
    return %arg0, %c0_i32 : i32, i32
  }
}

</mosaic_0001>

<llo_original>
// kernel: tpu_custom_call.1
$region0: #{tpu_custom_call.1}
  #allocation0 [shape = 'u32[]', space=smem, size = 0x4, offset = 0x4, fixed_abs, tag = 'smem constant byte address 0x4 - core index']
  #allocation1 [shape = 'u32[144,128]{1,0:T(1,128)}', space=vmem, size = 0x12000, scoped, tag = 'internal scratch']
  #allocation2 [shape = 'f32[512,128]{1,0:T(8,128)}', space=vmem, size = 0x40000, scoped, tag = 'scratch operand']
  %s0 = inlined_call_operand.hbm [shape: bf16[512,128], index: 0, kind: input, shape index: {}]
  %s1 = inlined_call_operand.hbm [shape: bf16[128,128], index: 1, kind: input, shape index: {}]
  %s2 = inlined_call_operand.vmem [shape: f32[1,128], index: 2, kind: input, shape index: {}]
  %s3 = inlined_call_operand.vmem [shape: f32[1,128], index: 3, kind: input, shape index: {}]
  %s4 = inlined_call_operand.hbm [shape: bf16[512,128], index: 4, kind: output, shape index: {}]
  %s5 = sld [smem:[#allocation0]]
  $region42: #{tpu_custom_call.1} parent=0
    _
  %s7 = ssub.s32 1, %s5
  %s8 = scalar_select 0, %s7, %s5
  $region1: #{tpu_custom_call.1} parent=0
    #allocation3 [shape = 'u8[131072]{0}', space=vmem, size = 0x20000, scoped, tag = 'input window, operand 0, single buffered']
    #allocation4 [shape = 's32[1]{0}', space=sflag, size = 0x4, scoped, tag = 'scoped memory for tpu_custom_call.1']
    #allocation5 [shape = 's32[1]{0}', space=sflag, size = 0x4, scoped, tag = 'scoped memory for tpu_custom_call.1']
    #allocation6 [shape = 'u8[32768]{0}', space=vmem, size = 0x8000, scoped, tag = 'input window, operand 1, single buffered']
    #allocation7 [shape = 's32[1]{0}', space=sflag, size = 0x4, scoped, tag = 'scoped memory for tpu_custom_call.1']
    #allocation8 [shape = 'u8[131072]{0}', space=vmem, size = 0x20000, scoped, tag = 'output window, operand 0, single buffered']
    %9 = vsyncpa [#allocation4], 0
    %10 = vsyncpa [#allocation7], 0
    %11 = vsyncpa [#allocation5], 0
    // Predicated region
    $region2: #{tpu_custom_call.1} parent=1 // pred_check
      _
    $region3: #{tpu_custom_call.1} parent=1 // pred_check_branch
      %13 = sbr.rel (0) target = $region5
    $region4: #{tpu_custom_call.1} parent=1 // pred_region
      %s15 = ssub.s32 4096, 4096
      %16 = vsyncadd [#allocation4], %s15
      %s17 = sshll.u32 [#allocation3], 4
      %s18 = int_to_ptr.vmem [resolvable:$true] %s17
      %23 = dma.hbm_to_vmem [thread:$0]  %s0, 4096, %s18, [#allocation4], 64, 64, 4
    $region5: #{tpu_custom_call.1} parent=1 // pred_fallthru
      _
    // Predicated region
    $region6: #{tpu_custom_call.1} parent=1 // pred_check
      _
    $region7: #{tpu_custom_call.1} parent=1 // pred_check_branch
      %25 = sbr.rel (0) target = $region9
    $region8: #{tpu_custom_call.1} parent=1 // pred_region
      %s27 = ssub.s32 1024, 1024
      %28 = vsyncadd [#allocation7], %s27
      %s29 = sshll.u32 [#allocation6], 4
      %s30 = int_to_ptr.vmem [resolvable:$true] %s29
      %35 = dma.hbm_to_vmem [thread:$0]  %s1, 1024, %s30, [#allocation7], 64, 64, 4
    $region9: #{tpu_custom_call.1} parent=1 // pred_fallthru
      _
    // Predicated region
    $region10: #{tpu_custom_call.1} parent=1 // pred_check
      _
    $region11: #{tpu_custom_call.1} parent=1 // pred_check_branch
      %37 = sbr.rel (0) target = $region13
    $region12: #{tpu_custom_call.1} parent=1 // pred_region
      _
    $region13: #{tpu_custom_call.1} parent=1 // pred_fallthru
      _
    // Predicated region
    $region14: #{tpu_custom_call.1} parent=1 // pred_check
      _
    $region15: #{tpu_custom_call.1} parent=1 // pred_check_branch
      %39 = sbr.rel (0) target = $region17
    $region16: #{tpu_custom_call.1} parent=1 // pred_region
      _
    $region17: #{tpu_custom_call.1} parent=1 // pred_fallthru
      _
    // Predicated region
    $region18: #{tpu_custom_call.1} parent=1 // pred_check
      _
    $region19: #{tpu_custom_call.1} parent=1 // pred_check_branch
      %41 = sbr.rel (0) target = $region21
    $region20: #{tpu_custom_call.1} parent=1 // pred_region
      %42 = dma.done [#allocation4], 4096
    $region21: #{tpu_custom_call.1} parent=1 // pred_fallthru
      _
    // Predicated region
    $region22: #{tpu_custom_call.1} parent=1 // pred_check
      _
    $region23: #{tpu_custom_call.1} parent=1 // pred_check_branch
      %44 = sbr.rel (0) target = $region25
    $region24: #{tpu_custom_call.1} parent=1 // pred_region
      %45 = dma.done [#allocation7], 1024
    $region25: #{tpu_custom_call.1} parent=1 // pred_fallthru
      _
    %p47 = scmp.eq.s32.totalorder 0, 0
    // Predicated region
    $region26: #{tpu_custom_call.1} parent=1 // pred_check
      %p48 = pneg %p47
    $region27: #{tpu_custom_call.1} parent=1 // pred_check_branch
      %50 = sbr.rel (%p48) target = $region29
    $region28: #{tpu_custom_call.1} parent=1 // pred_region
      %51 = vst [vmem:[#allocation2] sm:$0xff] 0.0
      %52 = vst [vmem:[#allocation2 + $0x8] sm:$0xff] 0.0
      %53 = vst [vmem:[#allocation2 + $0x10] sm:$0xff] 0.0
      %54 = vst [vmem:[#allocation2 + $0x18] sm:$0xff] 0.0
      %55 = vst [vmem:[#allocation2 + $0x20] sm:$0xff] 0.0
      %56 = vst [vmem:[#allocation2 + $0x28] sm:$0xff] 0.0
      %57 = vst [vmem:[#allocation2 + $0x30] sm:$0xff] 0.0
      %58 = vst [vmem:[#allocation2 + $0x38] sm:$0xff] 0.0
      %59 = vst [vmem:[#allocation2 + $0x40] sm:$0xff] 0.0
      %60 = vst [vmem:[#allocation2 + $0x48] sm:$0xff] 0.0
      %61 = vst [vmem:[#allocation2 + $0x50] sm:$0xff] 0.0
      %62 = vst [vmem:[#allocation2 + $0x58] sm:$0xff] 0.0
      %63 = vst [vmem:[#allocation2 + $0x60] sm:$0xff] 0.0
      %64 = vst [vmem:[#allocation2 + $0x68] sm:$0xff] 0.0
      %65 = vst [vmem:[#allocation2 + $0x70] sm:$0xff] 0.0
      %66 = vst [vmem:[#allocation2 + $0x78] sm:$0xff] 0.0
      %67 = vst [vmem:[#allocation2 + $0x80] sm:$0xff] 0.0
      %68 = vst [vmem:[#allocation2 + $0x88] sm:$0xff] 0.0
      %69 = vst [vmem:[#allocation2 + $0x90] sm:$0xff] 0.0
      %70 = vst [vmem:[#allocation2 + $0x98] sm:$0xff] 0.0
      %71 = vst [vmem:[#allocation2 + $0xa0] sm:$0xff] 0.0
      %72 = vst [vmem:[#allocation2 + $0xa8] sm:$0xff] 0.0
      %73 = vst [vmem:[#allocation2 + $0xb0] sm:$0xff] 0.0
      %74 = vst [vmem:[#allocation2 + $0xb8] sm:$0xff] 0.0
      %75 = vst [vmem:[#allocation2 + $0xc0] sm:$0xff] 0.0
      %76 = vst [vmem:[#allocation2 + $0xc8] sm:$0xff] 0.0
      %77 = vst [vmem:[#allocation2 + $0xd0] sm:$0xff] 0.0
      %78 = vst [vmem:[#allocation2 + $0xd8] sm:$0xff] 0.0
      %79 = vst [vmem:[#allocation2 + $0xe0] sm:$0xff] 0.0
      %80 = vst [vmem:[#allocation2 + $0xe8] sm:$0xff] 0.0
      %81 = vst [vmem:[#allocation2 + $0xf0] sm:$0xff] 0.0
      %82 = vst [vmem:[#allocation2 + $0xf8] sm:$0xff] 0.0
      %83 = vst [vmem:[#allocation2 + $0x100] sm:$0xff] 0.0
      %84 = vst [vmem:[#allocation2 + $0x108] sm:$0xff] 0.0
      %85 = vst [vmem:[#allocation2 + $0x110] sm:$0xff] 0.0
      %86 = vst [vmem:[#allocation2 + $0x118] sm:$0xff] 0.0
      %87 = vst [vmem:[#allocation2 + $0x120] sm:$0xff] 0.0
      %88 = vst [vmem:[#allocation2 + $0x128] sm:$0xff] 0.0
      %89 = vst [vmem:[#allocation2 + $0x130] sm:$0xff] 0.0
      %90 = vst [vmem:[#allocation2 + $0x138] sm:$0xff] 0.0
      %91 = vst [vmem:[#allocation2 + $0x140] sm:$0xff] 0.0
      %92 = vst [vmem:[#allocation2 + $0x148] sm:$0xff] 0.0
      %93 = vst [vmem:[#allocation2 + $0x150] sm:$0xff] 0.0
      %94 = vst [vmem:[#allocation2 + $0x158] sm:$0xff] 0.0
      %95 = vst [vmem:[#allocation2 + $0x160] sm:$0xff] 0.0
      %96 = vst [vmem:[#allocation2 + $0x168] sm:$0xff] 0.0
      %97 = vst [vmem:[#allocation2 + $0x170] sm:$0xff] 0.0
      %98 = vst [vmem:[#allocation2 + $0x178] sm:$0xff] 0.0
      %99 = vst [vmem:[#allocation2 + $0x180] sm:$0xff] 0.0
      %100 = vst [vmem:[#allocation2 + $0x188] sm:$0xff] 0.0
      %101 = vst [vmem:[#allocation2 + $0x190] sm:$0xff] 0.0
      %102 = vst [vmem:[#allocation2 + $0x198] sm:$0xff] 0.0
      %103 = vst [vmem:[#allocation2 + $0x1a0] sm:$0xff] 0.0
      %104 = vst [vmem:[#allocation2 + $0x1a8] sm:$0xff] 0.0
      %105 = vst [vmem:[#allocation2 + $0x1b0] sm:$0xff] 0.0
      %106 = vst [vmem:[#allocation2 + $0x1b8] sm:$0xff] 0.0
      %107 = vst [vmem:[#allocation2 + $0x1c0] sm:$0xff] 0.0
      %108 = vst [vmem:[#allocation2 + $0x1c8] sm:$0xff] 0.0
      %109 = vst [vmem:[#allocation2 + $0x1d0] sm:$0xff] 0.0
      %110 = vst [vmem:[#allocation2 + $0x1d8] sm:$0xff] 0.0
      %111 = vst [vmem:[#allocation2 + $0x1e0] sm:$0xff] 0.0
      %112 = vst [vmem:[#allocation2 + $0x1e8] sm:$0xff] 0.0
      %113 = vst [vmem:[#allocation2 + $0x1f0] sm:$0xff] 0.0
      %114 = vst [vmem:[#allocation2 + $0x1f8] sm:$0xff] 0.0
    $region29: #{tpu_custom_call.1} parent=1 // pred_fallthru
      _
    %v115 = vld [vmem:[#allocation2] sm:$0xff]
    %v116 = vld [vmem:[#allocation2 + $0x8] sm:$0xff]
    %v117 = vld [vmem:[#allocation2 + $0x10] sm:$0xff]
    %v118 = vld [vmem:[#allocation2 + $0x18] sm:$0xff]
    %v119 = vld [vmem:[#allocation2 + $0x20] sm:$0xff]
    %v120 = vld [vmem:[#allocation2 + $0x28] sm:$0xff]
    %v121 = vld [vmem:[#allocation2 + $0x30] sm:$0xff]
    %v122 = vld [vmem:[#allocation2 + $0x38] sm:$0xff]
    %v123 = vld [vmem:[#allocation2 + $0x40] sm:$0xff]
    %v124 = vld [vmem:[#allocation2 + $0x48] sm:$0xff]
    %v125 = vld [vmem:[#allocation2 + $0x50] sm:$0xff]
    %v126 = vld [vmem:[#allocation2 + $0x58] sm:$0xff]
    %v127 = vld [vmem:[#allocation2 + $0x60] sm:$0xff]
    %v128 = vld [vmem:[#allocation2 + $0x68] sm:$0xff]
    %v129 = vld [vmem:[#allocation2 + $0x70] sm:$0xff]
    %v130 = vld [vmem:[#allocation2 + $0x78] sm:$0xff]
    %v131 = vld [vmem:[#allocation2 + $0x80] sm:$0xff]
    %v132 = vld [vmem:[#allocation2 + $0x88] sm:$0xff]
    %v133 = vld [vmem:[#allocation2 + $0x90] sm:$0xff]
    %v134 = vld [vmem:[#allocation2 + $0x98] sm:$0xff]
    %v135 = vld [vmem:[#allocation2 + $0xa0] sm:$0xff]
    %v136 = vld [vmem:[#allocation2 + $0xa8] sm:$0xff]
    %v137 = vld [vmem:[#allocation2 + $0xb0] sm:$0xff]
    %v138 = vld [vmem:[#allocation2 + $0xb8] sm:$0xff]
    %v139 = vld [vmem:[#allocation2 + $0xc0] sm:$0xff]
    %v140 = vld [vmem:[#allocation2 + $0xc8] sm:$0xff]
    %v141 = vld [vmem:[#allocation2 + $0xd0] sm:$0xff]
    %v142 = vld [vmem:[#allocation2 + $0xd8] sm:$0xff]
    %v143 = vld [vmem:[#allocation2 + $0xe0] sm:$0xff]
    %v144 = vld [vmem:[#allocation2 + $0xe8] sm:$0xff]
    %v145 = vld [vmem:[#allocation2 + $0xf0] sm:$0xff]
    %v146 = vld [vmem:[#allocation2 + $0xf8] sm:$0xff]
    %v147 = vld [vmem:[#allocation2 + $0x100] sm:$0xff]
    %v148 = vld [vmem:[#allocation2 + $0x108] sm:$0xff]
    %v149 = vld [vmem:[#allocation2 + $0x110] sm:$0xff]
    %v150 = vld [vmem:[#allocation2 + $0x118] sm:$0xff]
    %v151 = vld [vmem:[#allocation2 + $0x120] sm:$0xff]
    %v152 = vld [vmem:[#allocation2 + $0x128] sm:$0xff]
    %v153 = vld [vmem:[#allocation2 + $0x130] sm:$0xff]
    %v154 = vld [vmem:[#allocation2 + $0x138] sm:$0xff]
    %v155 = vld [vmem:[#allocation2 + $0x140] sm:$0xff]
    %v156 = vld [vmem:[#allocation2 + $0x148] sm:$0xff]
    %v157 = vld [vmem:[#allocation2 + $0x150] sm:$0xff]
    %v158 = vld [vmem:[#allocation2 + $0x158] sm:$0xff]
    %v159 = vld [vmem:[#allocation2 + $0x160] sm:$0xff]
    %v160 = vld [vmem:[#allocation2 + $0x168] sm:$0xff]
    %v161 = vld [vmem:[#allocation2 + $0x170] sm:$0xff]
    %v162 = vld [vmem:[#allocation2 + $0x178] sm:$0xff]
    %v163 = vld [vmem:[#allocation2 + $0x180] sm:$0xff]
    %v164 = vld [vmem:[#allocation2 + $0x188] sm:$0xff]
    %v165 = vld [vmem:[#allocation2 + $0x190] sm:$0xff]
    %v166 = vld [vmem:[#allocation2 + $0x198] sm:$0xff]
    %v167 = vld [vmem:[#allocation2 + $0x1a0] sm:$0xff]
    %v168 = vld [vmem:[#allocation2 + $0x1a8] sm:$0xff]
    %v169 = vld [vmem:[#allocation2 + $0x1b0] sm:$0xff]
    %v170 = vld [vmem:[#allocation2 + $0x1b8] sm:$0xff]
    %v171 = vld [vmem:[#allocation2 + $0x1c0] sm:$0xff]
    %v172 = vld [vmem:[#allocation2 + $0x1c8] sm:$0xff]
    %v173 = vld [vmem:[#allocation2 + $0x1d0] sm:$0xff]
    %v174 = vld [vmem:[#allocation2 + $0x1d8] sm:$0xff]
    %v175 = vld [vmem:[#allocation2 + $0x1e0] sm:$0xff]
    %v176 = vld [vmem:[#allocation2 + $0x1e8] sm:$0xff]
    %v177 = vld [vmem:[#allocation2 + $0x1f0] sm:$0xff]
    %v178 = vld [vmem:[#allocation2 + $0x1f8] sm:$0xff]
    %v179 = vld [vmem:[#allocation3] sm:$0xf]
    %v180 = vld [vmem:[#allocation3 + $0x4] sm:$0xf]
    %v181 = vld [vmem:[#allocation3 + $0x8] sm:$0xf]
    %v182 = vld [vmem:[#allocation3 + $0xc] sm:$0xf]
    %v183 = vld [vmem:[#allocation3 + $0x10] sm:$0xf]
    %v184 = vld [vmem:[#allocation3 + $0x14] sm:$0xf]
    %v185 = vld [vmem:[#allocation3 + $0x18] sm:$0xf]
    %v186 = vld [vmem:[#allocation3 + $0x1c] sm:$0xf]
    %v187 = vld [vmem:[#allocation3 + $0x20] sm:$0xf]
    %v188 = vld [vmem:[#allocation3 + $0x24] sm:$0xf]
    %v189 = vld [vmem:[#allocation3 + $0x28] sm:$0xf]
    %v190 = vld [vmem:[#allocation3 + $0x2c] sm:$0xf]
    %v191 = vld [vmem:[#allocation3 + $0x30] sm:$0xf]
    %v192 = vld [vmem:[#allocation3 + $0x34] sm:$0xf]
    %v193 = vld [vmem:[#allocation3 + $0x38] sm:$0xf]
    %v194 = vld [vmem:[#allocation3 + $0x3c] sm:$0xf]
    %v195 = vld [vmem:[#allocation3 + $0x40] sm:$0xf]
    %v196 = vld [vmem:[#allocation3 + $0x44] sm:$0xf]
    %v197 = vld [vmem:[#allocation3 + $0x48] sm:$0xf]
    %v198 = vld [vmem:[#allocation3 + $0x4c] sm:$0xf]
    %v199 = vld [vmem:[#allocation3 + $0x50] sm:$0xf]
    %v200 = vld [vmem:[#allocation3 + $0x54] sm:$0xf]
    %v201 = vld [vmem:[#allocation3 + $0x58] sm:$0xf]
    %v202 = vld [vmem:[#allocation3 + $0x5c] sm:$0xf]
    %v203 = vld [vmem:[#allocation3 + $0x60] sm:$0xf]
    %v204 = vld [vmem:[#allocation3 + $0x64] sm:$0xf]
    %v205 = vld [vmem:[#allocation3 + $0x68] sm:$0xf]
    %v206 = vld [vmem:[#allocation3 + $0x6c] sm:$0xf]
    %v207 = vld [vmem:[#allocation3 + $0x70] sm:$0xf]
    %v208 = vld [vmem:[#allocation3 + $0x74] sm:$0xf]
    %v209 = vld [vmem:[#allocation3 + $0x78] sm:$0xf]
    %v210 = vld [vmem:[#allocation3 + $0x7c] sm:$0xf]
    %v211 = vld [vmem:[#allocation3 + $0x80] sm:$0xf]
    %v212 = vld [vmem:[#allocation3 + $0x84] sm:$0xf]
    %v213 = vld [vmem:[#allocation3 + $0x88] sm:$0xf]
    %v214 = vld [vmem:[#allocation3 + $0x8c] sm:$0xf]
    %v215 = vld [vmem:[#allocation3 + $0x90] sm:$0xf]
    %v216 = vld [vmem:[#allocation3 + $0x94] sm:$0xf]
    %v217 = vld [vmem:[#allocation3 + $0x98] sm:$0xf]
    %v218 = vld [vmem:[#allocation3 + $0x9c] sm:$0xf]
    %v219 = vld [vmem:[#allocation3 + $0xa0] sm:$0xf]
    %v220 = vld [vmem:[#allocation3 + $0xa4] sm:$0xf]
    %v221 = vld [vmem:[#allocation3 + $0xa8] sm:$0xf]
    %v222 = vld [vmem:[#allocation3 + $0xac] sm:$0xf]
    %v223 = vld [vmem:[#allocation3 + $0xb0] sm:$0xf]
    %v224 = vld [vmem:[#allocation3 + $0xb4] sm:$0xf]
    %v225 = vld [vmem:[#allocation3 + $0xb8] sm:$0xf]
    %v226 = vld [vmem:[#allocation3 + $0xbc] sm:$0xf]
    %v227 = vld [vmem:[#allocation3 + $0xc0] sm:$0xf]
    %v228 = vld [vmem:[#allocation3 + $0xc4] sm:$0xf]
    %v229 = vld [vmem:[#allocation3 + $0xc8] sm:$0xf]
    %v230 = vld [vmem:[#allocation3 + $0xcc] sm:$0xf]
    %v231 = vld [vmem:[#allocation3 + $0xd0] sm:$0xf]
    %v232 = vld [vmem:[#allocation3 + $0xd4] sm:$0xf]
    %v233 = vld [vmem:[#allocation3 + $0xd8] sm:$0xf]
    %v234 = vld [vmem:[#allocation3 + $0xdc] sm:$0xf]
    %v235 = vld [vmem:[#allocation3 + $0xe0] sm:$0xf]
    %v236 = vld [vmem:[#allocation3 + $0xe4] sm:$0xf]
    %v237 = vld [vmem:[#allocation3 + $0xe8] sm:$0xf]
    %v238 = vld [vmem:[#allocation3 + $0xec] sm:$0xf]
    %v239 = vld [vmem:[#allocation3 + $0xf0] sm:$0xf]
    %v240 = vld [vmem:[#allocation3 + $0xf4] sm:$0xf]
    %v241 = vld [vmem:[#allocation3 + $0xf8] sm:$0xf]
    %v242 = vld [vmem:[#allocation3 + $0xfc] sm:$0xf]
    %v243 = vld [vmem:[#allocation6] sm:$0xf]
    %v244 = vld [vmem:[#allocation6 + $0x4] sm:$0xf]
    %v245 = vld [vmem:[#allocation6 + $0x8] sm:$0xf]
    %v246 = vld [vmem:[#allocation6 + $0xc] sm:$0xf]
    %v247 = vld [vmem:[#allocation6 + $0x10] sm:$0xf]
    %v248 = vld [vmem:[#allocation6 + $0x14] sm:$0xf]
    %v249 = vld [vmem:[#allocation6 + $0x18] sm:$0xf]
    %v250 = vld [vmem:[#allocation6 + $0x1c] sm:$0xf]
    %v251 = vld [vmem:[#allocation6 + $0x20] sm:$0xf]
    %v252 = vld [vmem:[#allocation6 + $0x24] sm:$0xf]
    %v253 = vld [vmem:[#allocation6 + $0x28] sm:$0xf]
    %v254 = vld [vmem:[#allocation6 + $0x2c] sm:$0xf]
    %v255 = vld [vmem:[#allocation6 + $0x30] sm:$0xf]
    %v256 = vld [vmem:[#allocation6 + $0x34] sm:$0xf]
    %v257 = vld [vmem:[#allocation6 + $0x38] sm:$0xf]
    %v258 = vld [vmem:[#allocation6 + $0x3c] sm:$0xf]
    %v323 = vunpack.c.l.b16 %v179
    %v324 = vunpack.c.l.b16 %v180
    %v325 = vunpack.c.l.b16 %v181
    %v326 = vunpack.c.l.b16 %v182
    %v327 = vunpack.c.l.b16 %v183
    %v328 = vunpack.c.l.b16 %v184
    %v329 = vunpack.c.l.b16 %v185
    %v330 = vunpack.c.l.b16 %v186
    %v331 = vunpack.c.l.b16 %v187
    %v332 = vunpack.c.l.b16 %v188
    %v333 = vunpack.c.l.b16 %v189
    %v334 = vunpack.c.l.b16 %v190
    %v335 = vunpack.c.l.b16 %v191
    %v336 = vunpack.c.l.b16 %v192
    %v337 = vunpack.c.l.b16 %v193
    %v338 = vunpack.c.l.b16 %v194
    %v339 = vunpack.c.l.b16 %v195
    %v340 = vunpack.c.l.b16 %v196
    %v341 = vunpack.c.l.b16 %v197
    %v342 = vunpack.c.l.b16 %v198
    %v343 = vunpack.c.l.b16 %v199
    %v344 = vunpack.c.l.b16 %v200
    %v345 = vunpack.c.l.b16 %v201
    %v346 = vunpack.c.l.b16 %v202
    %v347 = vunpack.c.l.b16 %v203
    %v348 = vunpack.c.l.b16 %v204
    %v349 = vunpack.c.l.b16 %v205
    %v350 = vunpack.c.l.b16 %v206
    %v351 = vunpack.c.l.b16 %v207
    %v352 = vunpack.c.l.b16 %v208
    %v353 = vunpack.c.l.b16 %v209
    %v354 = vunpack.c.l.b16 %v210
    %v355 = vunpack.c.l.b16 %v211
    %v356 = vunpack.c.l.b16 %v212
    %v357 = vunpack.c.l.b16 %v213
    %v358 = vunpack.c.l.b16 %v214
    %v359 = vunpack.c.l.b16 %v215
    %v360 = vunpack.c.l.b16 %v216
    %v361 = vunpack.c.l.b16 %v217
    %v362 = vunpack.c.l.b16 %v218
    %v363 = vunpack.c.l.b16 %v219
    %v364 = vunpack.c.l.b16 %v220
    %v365 = vunpack.c.l.b16 %v221
    %v366 = vunpack.c.l.b16 %v222
    %v367 = vunpack.c.l.b16 %v223
    %v368 = vunpack.c.l.b16 %v224
    %v369 = vunpack.c.l.b16 %v225
    %v370 = vunpack.c.l.b16 %v226
    %v371 = vunpack.c.l.b16 %v227
    %v372 = vunpack.c.l.b16 %v228
    %v373 = vunpack.c.l.b16 %v229
    %v374 = vunpack.c.l.b16 %v230
    %v375 = vunpack.c.l.b16 %v231
    %v376 = vunpack.c.l.b16 %v232
    %v377 = vunpack.c.l.b16 %v233
    %v378 = vunpack.c.l.b16 %v234
    %v379 = vunpack.c.l.b16 %v235
    %v380 = vunpack.c.l.b16 %v236
    %v381 = vunpack.c.l.b16 %v237
    %v382 = vunpack.c.l.b16 %v238
    %v383 = vunpack.c.l.b16 %v239
    %v384 = vunpack.c.l.b16 %v240
    %v385 = vunpack.c.l.b16 %v241
    %v386 = vunpack.c.l.b16 %v242
    %v387 = vpack.c.b16 %v324, %v323
    %v388 = vpack.c.b16 %v326, %v325
    %v389 = vpack.c.b16 %v328, %v327
    %v390 = vpack.c.b16 %v330, %v329
    %v391 = vpack.c.b16 %v332, %v331
    %v392 = vpack.c.b16 %v334, %v333
    %v393 = vpack.c.b16 %v336, %v335
    %v394 = vpack.c.b16 %v338, %v337
    %v395 = vpack.c.b16 %v340, %v339
    %v396 = vpack.c.b16 %v342, %v341
    %v397 = vpack.c.b16 %v344, %v343
    %v398 = vpack.c.b16 %v346, %v345
    %v399 = vpack.c.b16 %v348, %v347
    %v400 = vpack.c.b16 %v350, %v349
    %v401 = vpack.c.b16 %v352, %v351
    %v402 = vpack.c.b16 %v354, %v353
    %v403 = vpack.c.b16 %v356, %v355
    %v404 = vpack.c.b16 %v358, %v357
    %v405 = vpack.c.b16 %v360, %v359
    %v406 = vpack.c.b16 %v362, %v361
    %v407 = vpack.c.b16 %v364, %v363
    %v408 = vpack.c.b16 %v366, %v365
    %v409 = vpack.c.b16 %v368, %v367
    %v410 = vpack.c.b16 %v370, %v369
    %v411 = vpack.c.b16 %v372, %v371
    %v412 = vpack.c.b16 %v374, %v373
    %v413 = vpack.c.b16 %v376, %v375
    %v414 = vpack.c.b16 %v378, %v377
    %v415 = vpack.c.b16 %v380, %v379
    %v416 = vpack.c.b16 %v382, %v381
    %v417 = vpack.c.b16 %v384, %v383
    %v418 = vpack.c.b16 %v386, %v385
    %v467 = vunpack.c.l.b16 %v243
    %v468 = vunpack.c.l.b16 %v244
    %v469 = vunpack.c.l.b16 %v245
    %v470 = vunpack.c.l.b16 %v246
    %v471 = vunpack.c.l.b16 %v247
    %v472 = vunpack.c.l.b16 %v248
    %v473 = vunpack.c.l.b16 %v249
    %v474 = vunpack.c.l.b16 %v250
    %v475 = vunpack.c.l.b16 %v251
    %v476 = vunpack.c.l.b16 %v252
    %v477 = vunpack.c.l.b16 %v253
    %v478 = vunpack.c.l.b16 %v254
    %v479 = vunpack.c.l.b16 %v255
    %v480 = vunpack.c.l.b16 %v256
    %v481 = vunpack.c.l.b16 %v257
    %v482 = vunpack.c.l.b16 %v258
    %v483 = vpack.c.b16 %v468, %v467
    %v484 = vpack.c.b16 %v470, %v469
    %v485 = vpack.c.b16 %v472, %v471
    %v486 = vpack.c.b16 %v474, %v473
    %v487 = vpack.c.b16 %v476, %v475
    %v488 = vpack.c.b16 %v478, %v477
    %v489 = vpack.c.b16 %v480, %v479
    %v490 = vpack.c.b16 %v482, %v481
    %499 = vmatprep.subr.bf16.mxu0 0
    %500 = vmatpush1.bf16.msra.mxu0 %v490
    %501 = vmatprep.subr.bf16.mxu0 0
    %502 = vmatpush1.bf16.msra.mxu0 %v489
    %503 = vmatprep.subr.bf16.mxu0 0
    %504 = vmatpush1.bf16.msra.mxu0 %v488
    %505 = vmatprep.subr.bf16.mxu0 0
    %506 = vmatpush1.bf16.msra.mxu0 %v487
    %507 = vmatprep.subr.bf16.mxu0 0
    %508 = vmatpush1.bf16.msra.mxu0 %v486
    %509 = vmatprep.subr.bf16.mxu0 0
    %510 = vmatpush1.bf16.msra.mxu0 %v485
    %511 = vmatprep.subr.bf16.mxu0 0
    %512 = vmatpush1.bf16.msra.mxu0 %v484
    %513 = vmatprep.subr.bf16.mxu0 0
    %514 = vmatpush1.bf16.msra.mxu0 %v483
    %515 = vmatprep.subr.bf16.mxu0 0
    %516 = vmatpush2.bf16.msra.mxu0 0
    %517 = vmatprep.subr.bf16.mxu0 0
    %518 = vmatpush2.bf16.msra.mxu0 0
    %519 = vmatprep.subr.bf16.mxu0 0
    %520 = vmatpush2.bf16.msra.mxu0 0
    %521 = vmatprep.subr.bf16.mxu0 0
    %522 = vmatpush2.bf16.msra.mxu0 0
    %523 = vmatprep.subr.bf16.mxu0 0
    %524 = vmatpush2.bf16.msra.mxu0 0
    %525 = vmatprep.subr.bf16.mxu0 0
    %526 = vmatpush2.bf16.msra.mxu0 0
    %527 = vmatprep.subr.bf16.mxu0 0
    %528 = vmatpush2.bf16.msra.mxu0 0
    %529 = vmatprep.subr.bf16.mxu0 0
    %530 = vmatpush2.bf16.msra.mxu0 0
    %531 = vmatprep.mubr.bf16.mxu0 0
    %532 = vmatmul.mubr.bf16.gmra.mxu0 %v387
    %v533 = vpop.f32.mrf.mxu0
    %v534 = vadd.f32 0.0, %v533
    %v535 = vpop.f32.mrf.mxu0
    %v536 = vpop.f32.mrf.mxu0
    %v537 = vadd.f32 0.0, %v536
    %v538 = vpop.f32.mrf.mxu0
    %539 = vmatprep.mubr.bf16.mxu0 0
    %540 = vmatmul.mubr.bf16.gmra.mxu0 %v388
    %v541 = vpop.f32.mrf.mxu0
    %v542 = vadd.f32 0.0, %v541
    %v543 = vpop.f32.mrf.mxu0
    %v544 = vpop.f32.mrf.mxu0
    %v545 = vadd.f32 0.0, %v544
    %v546 = vpop.f32.mrf.mxu0
    %547 = vmatprep.mubr.bf16.mxu0 0
    %548 = vmatmul.mubr.bf16.gmra.mxu0 %v389
    %v549 = vpop.f32.mrf.mxu0
    %v550 = vadd.f32 0.0, %v549
    %v551 = vpop.f32.mrf.mxu0
    %v552 = vpop.f32.mrf.mxu0
    %v553 = vadd.f32 0.0, %v552
    %v554 = vpop.f32.mrf.mxu0
    %555 = vmatprep.mubr.bf16.mxu0 0
    %556 = vmatmul.mubr.bf16.gmra.mxu0 %v390
    %v557 = vpop.f32.mrf.mxu0
    %v558 = vadd.f32 0.0, %v557
    %v559 = vpop.f32.mrf.mxu0
    %v560 = vpop.f32.mrf.mxu0
    %v561 = vadd.f32 0.0, %v560
    %v562 = vpop.f32.mrf.mxu0
    %563 = vmatprep.mubr.bf16.mxu0 0
    %564 = vmatmul.mubr.bf16.gmra.mxu0 %v391
    %v565 = vpop.f32.mrf.mxu0
    %v566 = vadd.f32 0.0, %v565
    %v567 = vpop.f32.mrf.mxu0
    %v568 = vpop.f32.mrf.mxu0
    %v569 = vadd.f32 0.0, %v568
    %v570 = vpop.f32.mrf.mxu0
    %571 = vmatprep.mubr.bf16.mxu0 0
    %572 = vmatmul.mubr.bf16.gmra.mxu0 %v392
    %v573 = vpop.f32.mrf.mxu0
    %v574 = vadd.f32 0.0, %v573
    %v575 = vpop.f32.mrf.mxu0
    %v576 = vpop.f32.mrf.mxu0
    %v577 = vadd.f32 0.0, %v576
    %v578 = vpop.f32.mrf.mxu0
    %579 = vmatprep.mubr.bf16.mxu0 0
    %580 = vmatmul.mubr.bf16.gmra.mxu0 %v393
    %v581 = vpop.f32.mrf.mxu0
    %v582 = vadd.f32 0.0, %v581
    %v583 = vpop.f32.mrf.mxu0
    %v584 = vpop.f32.mrf.mxu0
    %v585 = vadd.f32 0.0, %v584
    %v586 = vpop.f32.mrf.mxu0
    %587 = vmatprep.mubr.bf16.mxu0 0
    %588 = vmatmul.mubr.bf16.gmra.mxu0 %v394
    %v589 = vpop.f32.mrf.mxu0
    %v590 = vadd.f32 0.0, %v589
    %v591 = vpop.f32.mrf.mxu0
    %v592 = vpop.f32.mrf.mxu0
    %v593 = vadd.f32 0.0, %v592
    %v594 = vpop.f32.mrf.mxu0
    %595 = vmatprep.mubr.bf16.mxu0 0
    %596 = vmatmul.mubr.bf16.gmra.mxu0 %v395
    %v597 = vpop.f32.mrf.mxu0
    %v598 = vadd.f32 0.0, %v597
    %v599 = vpop.f32.mrf.mxu0
    %v600 = vpop.f32.mrf.mxu0
    %v601 = vadd.f32 0.0, %v600
    %v602 = vpop.f32.mrf.mxu0
    %603 = vmatprep.mubr.bf16.mxu0 0
    %604 = vmatmul.mubr.bf16.gmra.mxu0 %v396
    %v605 = vpop.f32.mrf.mxu0
    %v606 = vadd.f32 0.0, %v605
    %v607 = vpop.f32.mrf.mxu0
    %v608 = vpop.f32.mrf.mxu0
    %v609 = vadd.f32 0.0, %v608
    %v610 = vpop.f32.mrf.mxu0
    %611 = vmatprep.mubr.bf16.mxu0 0
    %612 = vmatmul.mubr.bf16.gmra.mxu0 %v397
    %v613 = vpop.f32.mrf.mxu0
    %v614 = vadd.f32 0.0, %v613
    %v615 = vpop.f32.mrf.mxu0
    %v616 = vpop.f32.mrf.mxu0
    %v617 = vadd.f32 0.0, %v616
    %v618 = vpop.f32.mrf.mxu0
    %619 = vmatprep.mubr.bf16.mxu0 0
    %620 = vmatmul.mubr.bf16.gmra.mxu0 %v398
    %v621 = vpop.f32.mrf.mxu0
    %v622 = vadd.f32 0.0, %v621
    %v623 = vpop.f32.mrf.mxu0
    %v624 = vpop.f32.mrf.mxu0
    %v625 = vadd.f32 0.0, %v624
    %v626 = vpop.f32.mrf.mxu0
    %627 = vmatprep.mubr.bf16.mxu0 0
    %628 = vmatmul.mubr.bf16.gmra.mxu0 %v399
    %v629 = vpop.f32.mrf.mxu0
    %v630 = vadd.f32 0.0, %v629
    %v631 = vpop.f32.mrf.mxu0
    %v632 = vpop.f32.mrf.mxu0
    %v633 = vadd.f32 0.0, %v632
    %v634 = vpop.f32.mrf.mxu0
    %635 = vmatprep.mubr.bf16.mxu0 0
    %636 = vmatmul.mubr.bf16.gmra.mxu0 %v400
    %v637 = vpop.f32.mrf.mxu0
    %v638 = vadd.f32 0.0, %v637
    %v639 = vpop.f32.mrf.mxu0
    %v640 = vpop.f32.mrf.mxu0
    %v641 = vadd.f32 0.0, %v640
    %v642 = vpop.f32.mrf.mxu0
    %643 = vmatprep.mubr.bf16.mxu0 0
    %644 = vmatmul.mubr.bf16.gmra.mxu0 %v401
    %v645 = vpop.f32.mrf.mxu0
    %v646 = vadd.f32 0.0, %v645
    %v647 = vpop.f32.mrf.mxu0
    %v648 = vpop.f32.mrf.mxu0
    %v649 = vadd.f32 0.0, %v648
    %v650 = vpop.f32.mrf.mxu0
    %651 = vmatprep.mubr.bf16.mxu0 0
    %652 = vmatmul.mubr.bf16.gmra.mxu0 %v402
    %v653 = vpop.f32.mrf.mxu0
    %v654 = vadd.f32 0.0, %v653
    %v655 = vpop.f32.mrf.mxu0
    %v656 = vpop.f32.mrf.mxu0
    %v657 = vadd.f32 0.0, %v656
    %v658 = vpop.f32.mrf.mxu0
    %659 = vmatprep.mubr.bf16.mxu0 0
    %660 = vmatmul.mubr.bf16.gmra.mxu0 %v403
    %v661 = vpop.f32.mrf.mxu0
    %v662 = vadd.f32 0.0, %v661
    %v663 = vpop.f32.mrf.mxu0
    %v664 = vpop.f32.mrf.mxu0
    %v665 = vadd.f32 0.0, %v664
    %v666 = vpop.f32.mrf.mxu0
    %667 = vmatprep.mubr.bf16.mxu0 0
    %668 = vmatmul.mubr.bf16.gmra.mxu0 %v404
    %v669 = vpop.f32.mrf.mxu0
    %v670 = vadd.f32 0.0, %v669
    %v671 = vpop.f32.mrf.mxu0
    %v672 = vpop.f32.mrf.mxu0
    %v673 = vadd.f32 0.0, %v672
    %v674 = vpop.f32.mrf.mxu0
    %675 = vmatprep.mubr.bf16.mxu0 0
    %676 = vmatmul.mubr.bf16.gmra.mxu0 %v405
    %v677 = vpop.f32.mrf.mxu0
    %v678 = vadd.f32 0.0, %v677
    %v679 = vpop.f32.mrf.mxu0
    %v680 = vpop.f32.mrf.mxu0
    %v681 = vadd.f32 0.0, %v680
    %v682 = vpop.f32.mrf.mxu0
    %683 = vmatprep.mubr.bf16.mxu0 0
    %684 = vmatmul.mubr.bf16.gmra.mxu0 %v406
    %v685 = vpop.f32.mrf.mxu0
    %v686 = vadd.f32 0.0, %v685
    %v687 = vpop.f32.mrf.mxu0
    %v688 = vpop.f32.mrf.mxu0
    %v689 = vadd.f32 0.0, %v688
    %v690 = vpop.f32.mrf.mxu0
    %691 = vmatprep.mubr.bf16.mxu0 0
    %692 = vmatmul.mubr.bf16.gmra.mxu0 %v407
    %v693 = vpop.f32.mrf.mxu0
    %v694 = vadd.f32 0.0, %v693
    %v695 = vpop.f32.mrf.mxu0
    %v696 = vpop.f32.mrf.mxu0
    %v697 = vadd.f32 0.0, %v696
    %v698 = vpop.f32.mrf.mxu0
    %699 = vmatprep.mubr.bf16.mxu0 0
    %700 = vmatmul.mubr.bf16.gmra.mxu0 %v408
    %v701 = vpop.f32.mrf.mxu0
    %v702 = vadd.f32 0.0, %v701
    %v703 = vpop.f32.mrf.mxu0
    %v704 = vpop.f32.mrf.mxu0
    %v705 = vadd.f32 0.0, %v704
    %v706 = vpop.f32.mrf.mxu0
    %707 = vmatprep.mubr.bf16.mxu0 0
    %708 = vmatmul.mubr.bf16.gmra.mxu0 %v409
    %v709 = vpop.f32.mrf.mxu0
    %v710 = vadd.f32 0.0, %v709
    %v711 = vpop.f32.mrf.mxu0
    %v712 = vpop.f32.mrf.mxu0
    %v713 = vadd.f32 0.0, %v712
    %v714 = vpop.f32.mrf.mxu0
    %715 = vmatprep.mubr.bf16.mxu0 0
    %716 = vmatmul.mubr.bf16.gmra.mxu0 %v410
    %v717 = vpop.f32.mrf.mxu0
    %v718 = vadd.f32 0.0, %v717
    %v719 = vpop.f32.mrf.mxu0
    %v720 = vpop.f32.mrf.mxu0
    %v721 = vadd.f32 0.0, %v720
    %v722 = vpop.f32.mrf.mxu0
    %723 = vmatprep.mubr.bf16.mxu0 0
    %724 = vmatmul.mubr.bf16.gmra.mxu0 %v411
    %v725 = vpop.f32.mrf.mxu0
    %v726 = vadd.f32 0.0, %v725
    %v727 = vpop.f32.mrf.mxu0
    %v728 = vpop.f32.mrf.mxu0
    %v729 = vadd.f32 0.0, %v728
    %v730 = vpop.f32.mrf.mxu0
    %731 = vmatprep.mubr.bf16.mxu0 0
    %732 = vmatmul.mubr.bf16.gmra.mxu0 %v412
    %v733 = vpop.f32.mrf.mxu0
    %v734 = vadd.f32 0.0, %v733
    %v735 = vpop.f32.mrf.mxu0
    %v736 = vpop.f32.mrf.mxu0
    %v737 = vadd.f32 0.0, %v736
    %v738 = vpop.f32.mrf.mxu0
    %739 = vmatprep.mubr.bf16.mxu0 0
    %740 = vmatmul.mubr.bf16.gmra.mxu0 %v413
    %v741 = vpop.f32.mrf.mxu0
    %v742 = vadd.f32 0.0, %v741
    %v743 = vpop.f32.mrf.mxu0
    %v744 = vpop.f32.mrf.mxu0
    %v745 = vadd.f32 0.0, %v744
    %v746 = vpop.f32.mrf.mxu0
    %747 = vmatprep.mubr.bf16.mxu0 0
    %748 = vmatmul.mubr.bf16.gmra.mxu0 %v414
    %v749 = vpop.f32.mrf.mxu0
    %v750 = vadd.f32 0.0, %v749
    %v751 = vpop.f32.mrf.mxu0
    %v752 = vpop.f32.mrf.mxu0
    %v753 = vadd.f32 0.0, %v752
    %v754 = vpop.f32.mrf.mxu0
    %755 = vmatprep.mubr.bf16.mxu0 0
    %756 = vmatmul.mubr.bf16.gmra.mxu0 %v415
    %v757 = vpop.f32.mrf.mxu0
    %v758 = vadd.f32 0.0, %v757
    %v759 = vpop.f32.mrf.mxu0
    %v760 = vpop.f32.mrf.mxu0
    %v761 = vadd.f32 0.0, %v760
    %v762 = vpop.f32.mrf.mxu0
    %763 = vmatprep.mubr.bf16.mxu0 0
    %764 = vmatmul.mubr.bf16.gmra.mxu0 %v416
    %v765 = vpop.f32.mrf.mxu0
    %v766 = vadd.f32 0.0, %v765
    %v767 = vpop.f32.mrf.mxu0
    %v768 = vpop.f32.mrf.mxu0
    %v769 = vadd.f32 0.0, %v768
    %v770 = vpop.f32.mrf.mxu0
    %771 = vmatprep.mubr.bf16.mxu0 0
    %772 = vmatmul.mubr.bf16.gmra.mxu0 %v417
    %v773 = vpop.f32.mrf.mxu0
    %v774 = vadd.f32 0.0, %v773
    %v775 = vpop.f32.mrf.mxu0
    %v776 = vpop.f32.mrf.mxu0
    %v777 = vadd.f32 0.0, %v776
    %v778 = vpop.f32.mrf.mxu0
    %779 = vmatprep.mubr.bf16.mxu0 0
    %780 = vmatmul.mubr.bf16.gmra.mxu0 %v418
    %v781 = vpop.f32.mrf.mxu0
    %v782 = vadd.f32 0.0, %v781
    %v783 = vpop.f32.mrf.mxu0
    %v784 = vpop.f32.mrf.mxu0
    %v785 = vadd.f32 0.0, %v784
    %v786 = vpop.f32.mrf.mxu0
    %787 = vdwg.mxu0
    %v788 = vadd.f32 %v115, %v534
    %v789 = vadd.f32 %v116, %v537
    %v790 = vadd.f32 %v117, %v542
    %v791 = vadd.f32 %v118, %v545
    %v792 = vadd.f32 %v119, %v550
    %v793 = vadd.f32 %v120, %v553
    %v794 = vadd.f32 %v121, %v558
    %v795 = vadd.f32 %v122, %v561
    %v796 = vadd.f32 %v123, %v566
    %v797 = vadd.f32 %v124, %v569
    %v798 = vadd.f32 %v125, %v574
    %v799 = vadd.f32 %v126, %v577
    %v800 = vadd.f32 %v127, %v582
    %v801 = vadd.f32 %v128, %v585
    %v802 = vadd.f32 %v129, %v590
    %v803 = vadd.f32 %v130, %v593
    %v804 = vadd.f32 %v131, %v598
    %v805 = vadd.f32 %v132, %v601
    %v806 = vadd.f32 %v133, %v606
    %v807 = vadd.f32 %v134, %v609
    %v808 = vadd.f32 %v135, %v614
    %v809 = vadd.f32 %v136, %v617
    %v810 = vadd.f32 %v137, %v622
    %v811 = vadd.f32 %v138, %v625
    %v812 = vadd.f32 %v139, %v630
    %v813 = vadd.f32 %v140, %v633
    %v814 = vadd.f32 %v141, %v638
    %v815 = vadd.f32 %v142, %v641
    %v816 = vadd.f32 %v143, %v646
    %v817 = vadd.f32 %v144, %v649
    %v818 = vadd.f32 %v145, %v654
    %v819 = vadd.f32 %v146, %v657
    %v820 = vadd.f32 %v147, %v662
    %v821 = vadd.f32 %v148, %v665
    %v822 = vadd.f32 %v149, %v670
    %v823 = vadd.f32 %v150, %v673
    %v824 = vadd.f32 %v151, %v678
    %v825 = vadd.f32 %v152, %v681
    %v826 = vadd.f32 %v153, %v686
    %v827 = vadd.f32 %v154, %v689
    %v828 = vadd.f32 %v155, %v694
    %v829 = vadd.f32 %v156, %v697
    %v830 = vadd.f32 %v157, %v702
    %v831 = vadd.f32 %v158, %v705
    %v832 = vadd.f32 %v159, %v710
    %v833 = vadd.f32 %v160, %v713
    %v834 = vadd.f32 %v161, %v718
    %v835 = vadd.f32 %v162, %v721
    %v836 = vadd.f32 %v163, %v726
    %v837 = vadd.f32 %v164, %v729
    %v838 = vadd.f32 %v165, %v734
    %v839 = vadd.f32 %v166, %v737
    %v840 = vadd.f32 %v167, %v742
    %v841 = vadd.f32 %v168, %v745
    %v842 = vadd.f32 %v169, %v750
    %v843 = vadd.f32 %v170, %v753
    %v844 = vadd.f32 %v171, %v758
    %v845 = vadd.f32 %v172, %v761
    %v846 = vadd.f32 %v173, %v766
    %v847 = vadd.f32 %v174, %v769
    %v848 = vadd.f32 %v175, %v774
    %v849 = vadd.f32 %v176, %v777
    %v850 = vadd.f32 %v177, %v782
    %v851 = vadd.f32 %v178, %v785
    %852 = vst [vmem:[#allocation2] sm:$0xff] %v788
    %853 = vst [vmem:[#allocation2 + $0x8] sm:$0xff] %v789
    %854 = vst [vmem:[#allocation2 + $0x10] sm:$0xff] %v790
    %855 = vst [vmem:[#allocation2 + $0x18] sm:$0xff] %v791
    %856 = vst [vmem:[#allocation2 + $0x20] sm:$0xff] %v792
    %857 = vst [vmem:[#allocation2 + $0x28] sm:$0xff] %v793
    %858 = vst [vmem:[#allocation2 + $0x30] sm:$0xff] %v794
    %859 = vst [vmem:[#allocation2 + $0x38] sm:$0xff] %v795
    %860 = vst [vmem:[#allocation2 + $0x40] sm:$0xff] %v796
    %861 = vst [vmem:[#allocation2 + $0x48] sm:$0xff] %v797
    %862 = vst [vmem:[#allocation2 + $0x50] sm:$0xff] %v798
    %863 = vst [vmem:[#allocation2 + $0x58] sm:$0xff] %v799
    %864 = vst [vmem:[#allocation2 + $0x60] sm:$0xff] %v800
    %865 = vst [vmem:[#allocation2 + $0x68] sm:$0xff] %v801
    %866 = vst [vmem:[#allocation2 + $0x70] sm:$0xff] %v802
    %867 = vst [vmem:[#allocation2 + $0x78] sm:$0xff] %v803
    %868 = vst [vmem:[#allocation2 + $0x80] sm:$0xff] %v804
    %869 = vst [vmem:[#allocation2 + $0x88] sm:$0xff] %v805
    %870 = vst [vmem:[#allocation2 + $0x90] sm:$0xff] %v806
    %871 = vst [vmem:[#allocation2 + $0x98] sm:$0xff] %v807
    %872 = vst [vmem:[#allocation2 + $0xa0] sm:$0xff] %v808
    %873 = vst [vmem:[#allocation2 + $0xa8] sm:$0xff] %v809
    %874 = vst [vmem:[#allocation2 + $0xb0] sm:$0xff] %v810
    %875 = vst [vmem:[#allocation2 + $0xb8] sm:$0xff] %v811
    %876 = vst [vmem:[#allocation2 + $0xc0] sm:$0xff] %v812
    %877 = vst [vmem:[#allocation2 + $0xc8] sm:$0xff] %v813
    %878 = vst [vmem:[#allocation2 + $0xd0] sm:$0xff] %v814
    %879 = vst [vmem:[#allocation2 + $0xd8] sm:$0xff] %v815
    %880 = vst [vmem:[#allocation2 + $0xe0] sm:$0xff] %v816
    %881 = vst [vmem:[#allocation2 + $0xe8] sm:$0xff] %v817
    %882 = vst [vmem:[#allocation2 + $0xf0] sm:$0xff] %v818
    %883 = vst [vmem:[#allocation2 + $0xf8] sm:$0xff] %v819
    %884 = vst [vmem:[#allocation2 + $0x100] sm:$0xff] %v820
    %885 = vst [vmem:[#allocation2 + $0x108] sm:$0xff] %v821
    %886 = vst [vmem:[#allocation2 + $0x110] sm:$0xff] %v822
    %887 = vst [vmem:[#allocation2 + $0x118] sm:$0xff] %v823
    %888 = vst [vmem:[#allocation2 + $0x120] sm:$0xff] %v824
    %889 = vst [vmem:[#allocation2 + $0x128] sm:$0xff] %v825
    %890 = vst [vmem:[#allocation2 + $0x130] sm:$0xff] %v826
    %891 = vst [vmem:[#allocation2 + $0x138] sm:$0xff] %v827
    %892 = vst [vmem:[#allocation2 + $0x140] sm:$0xff] %v828
    %893 = vst [vmem:[#allocation2 + $0x148] sm:$0xff] %v829
    %894 = vst [vmem:[#allocation2 + $0x150] sm:$0xff] %v830
    %895 = vst [vmem:[#allocation2 + $0x158] sm:$0xff] %v831
    %896 = vst [vmem:[#allocation2 + $0x160] sm:$0xff] %v832
    %897 = vst [vmem:[#allocation2 + $0x168] sm:$0xff] %v833
    %898 = vst [vmem:[#allocation2 + $0x170] sm:$0xff] %v834
    %899 = vst [vmem:[#allocation2 + $0x178] sm:$0xff] %v835
    %900 = vst [vmem:[#allocation2 + $0x180] sm:$0xff] %v836
    %901 = vst [vmem:[#allocation2 + $0x188] sm:$0xff] %v837
    %902 = vst [vmem:[#allocation2 + $0x190] sm:$0xff] %v838
    %903 = vst [vmem:[#allocation2 + $0x198] sm:$0xff] %v839
    %904 = vst [vmem:[#allocation2 + $0x1a0] sm:$0xff] %v840
    %905 = vst [vmem:[#allocation2 + $0x1a8] sm:$0xff] %v841
    %906 = vst [vmem:[#allocation2 + $0x1b0] sm:$0xff] %v842
    %907 = vst [vmem:[#allocation2 + $0x1b8] sm:$0xff] %v843
    %908 = vst [vmem:[#allocation2 + $0x1c0] sm:$0xff] %v844
    %909 = vst [vmem:[#allocation2 + $0x1c8] sm:$0xff] %v845
    %910 = vst [vmem:[#allocation2 + $0x1d0] sm:$0xff] %v846
    %911 = vst [vmem:[#allocation2 + $0x1d8] sm:$0xff] %v847
    %912 = vst [vmem:[#allocation2 + $0x1e0] sm:$0xff] %v848
    %913 = vst [vmem:[#allocation2 + $0x1e8] sm:$0xff] %v849
    %914 = vst [vmem:[#allocation2 + $0x1f0] sm:$0xff] %v850
    %915 = vst [vmem:[#allocation2 + $0x1f8] sm:$0xff] %v851
    // Predicated region
    $region30: #{tpu_custom_call.1} parent=1 // pred_check
      %p916 = pneg %p47
    $region31: #{tpu_custom_call.1} parent=1 // pred_check_branch
      %918 = sbr.rel (%p916) target = $region33
    $region32: #{tpu_custom_call.1} parent=1 // pred_region
      %v919 = vld [vmem:[#allocation2] sm:$0xff]
      %v920 = vld [vmem:[#allocation2 + $0x8] sm:$0xff]
      %v921 = vld [vmem:[#allocation2 + $0x10] sm:$0xff]
      %v922 = vld [vmem:[#allocation2 + $0x18] sm:$0xff]
      %v923 = vld [vmem:[#allocation2 + $0x20] sm:$0xff]
      %v924 = vld [vmem:[#allocation2 + $0x28] sm:$0xff]
      %v925 = vld [vmem:[#allocation2 + $0x30] sm:$0xff]
      %v926 = vld [vmem:[#allocation2 + $0x38] sm:$0xff]
      %v927 = vld [vmem:[#allocation2 + $0x40] sm:$0xff]
      %v928 = vld [vmem:[#allocation2 + $0x48] sm:$0xff]
      %v929 = vld [vmem:[#allocation2 + $0x50] sm:$0xff]
      %v930 = vld [vmem:[#allocation2 + $0x58] sm:$0xff]
      %v931 = vld [vmem:[#allocation2 + $0x60] sm:$0xff]
      %v932 = vld [vmem:[#allocation2 + $0x68] sm:$0xff]
      %v933 = vld [vmem:[#allocation2 + $0x70] sm:$0xff]
      %v934 = vld [vmem:[#allocation2 + $0x78] sm:$0xff]
      %v935 = vld [vmem:[#allocation2 + $0x80] sm:$0xff]
      %v936 = vld [vmem:[#allocation2 + $0x88] sm:$0xff]
      %v937 = vld [vmem:[#allocation2 + $0x90] sm:$0xff]
      %v938 = vld [vmem:[#allocation2 + $0x98] sm:$0xff]
      %v939 = vld [vmem:[#allocation2 + $0xa0] sm:$0xff]
      %v940 = vld [vmem:[#allocation2 + $0xa8] sm:$0xff]
      %v941 = vld [vmem:[#allocation2 + $0xb0] sm:$0xff]
      %v942 = vld [vmem:[#allocation2 + $0xb8] sm:$0xff]
      %v943 = vld [vmem:[#allocation2 + $0xc0] sm:$0xff]
      %v944 = vld [vmem:[#allocation2 + $0xc8] sm:$0xff]
      %v945 = vld [vmem:[#allocation2 + $0xd0] sm:$0xff]
      %v946 = vld [vmem:[#allocation2 + $0xd8] sm:$0xff]
      %v947 = vld [vmem:[#allocation2 + $0xe0] sm:$0xff]
      %v948 = vld [vmem:[#allocation2 + $0xe8] sm:$0xff]
      %v949 = vld [vmem:[#allocation2 + $0xf0] sm:$0xff]
      %v950 = vld [vmem:[#allocation2 + $0xf8] sm:$0xff]
      %v951 = vld [vmem:[#allocation2 + $0x100] sm:$0xff]
      %v952 = vld [vmem:[#allocation2 + $0x108] sm:$0xff]
      %v953 = vld [vmem:[#allocation2 + $0x110] sm:$0xff]
      %v954 = vld [vmem:[#allocation2 + $0x118] sm:$0xff]
      %v955 = vld [vmem:[#allocation2 + $0x120] sm:$0xff]
      %v956 = vld [vmem:[#allocation2 + $0x128] sm:$0xff]
      %v957 = vld [vmem:[#allocation2 + $0x130] sm:$0xff]
      %v958 = vld [vmem:[#allocation2 + $0x138] sm:$0xff]
      %v959 = vld [vmem:[#allocation2 + $0x140] sm:$0xff]
      %v960 = vld [vmem:[#allocation2 + $0x148] sm:$0xff]
      %v961 = vld [vmem:[#allocation2 + $0x150] sm:$0xff]
      %v962 = vld [vmem:[#allocation2 + $0x158] sm:$0xff]
      %v963 = vld [vmem:[#allocation2 + $0x160] sm:$0xff]
      %v964 = vld [vmem:[#allocation2 + $0x168] sm:$0xff]
      %v965 = vld [vmem:[#allocation2 + $0x170] sm:$0xff]
      %v966 = vld [vmem:[#allocation2 + $0x178] sm:$0xff]
      %v967 = vld [vmem:[#allocation2 + $0x180] sm:$0xff]
      %v968 = vld [vmem:[#allocation2 + $0x188] sm:$0xff]
      %v969 = vld [vmem:[#allocation2 + $0x190] sm:$0xff]
      %v970 = vld [vmem:[#allocation2 + $0x198] sm:$0xff]
      %v971 = vld [vmem:[#allocation2 + $0x1a0] sm:$0xff]
      %v972 = vld [vmem:[#allocation2 + $0x1a8] sm:$0xff]
      %v973 = vld [vmem:[#allocation2 + $0x1b0] sm:$0xff]
      %v974 = vld [vmem:[#allocation2 + $0x1b8] sm:$0xff]
      %v975 = vld [vmem:[#allocation2 + $0x1c0] sm:$0xff]
      %v976 = vld [vmem:[#allocation2 + $0x1c8] sm:$0xff]
      %v977 = vld [vmem:[#allocation2 + $0x1d0] sm:$0xff]
      %v978 = vld [vmem:[#allocation2 + $0x1d8] sm:$0xff]
      %v979 = vld [vmem:[#allocation2 + $0x1e0] sm:$0xff]
      %v980 = vld [vmem:[#allocation2 + $0x1e8] sm:$0xff]
      %v981 = vld [vmem:[#allocation2 + $0x1f0] sm:$0xff]
      %v982 = vld [vmem:[#allocation2 + $0x1f8] sm:$0xff]
      %v983 = vld [vmem:[%s2] sm:$0x1]
      %v985 = vlaneseq
      %v986 = vshrl.u32 %v985, 7
      %v987 = vsub.s32 0, %v986
      %v988 = vrot.slane %v983, %v987
      %v990 = vmul.f32 %v919, %v988
      %v991 = vmul.f32 %v920, %v988
      %v992 = vmul.f32 %v921, %v988
      %v993 = vmul.f32 %v922, %v988
      %v994 = vmul.f32 %v923, %v988
      %v995 = vmul.f32 %v924, %v988
      %v996 = vmul.f32 %v925, %v988
      %v997 = vmul.f32 %v926, %v988
      %v998 = vmul.f32 %v927, %v988
      %v999 = vmul.f32 %v928, %v988
      %v1000 = vmul.f32 %v929, %v988
      %v1001 = vmul.f32 %v930, %v988
      %v1002 = vmul.f32 %v931, %v988
      %v1003 = vmul.f32 %v932, %v988
      %v1004 = vmul.f32 %v933, %v988
      %v1005 = vmul.f32 %v934, %v988
      %v1006 = vmul.f32 %v935, %v988
      %v1007 = vmul.f32 %v936, %v988
      %v1008 = vmul.f32 %v937, %v988
      %v1009 = vmul.f32 %v938, %v988
      %v1010 = vmul.f32 %v939, %v988
      %v1011 = vmul.f32 %v940, %v988
      %v1012 = vmul.f32 %v941, %v988
      %v1013 = vmul.f32 %v942, %v988
      %v1014 = vmul.f32 %v943, %v988
      %v1015 = vmul.f32 %v944, %v988
      %v1016 = vmul.f32 %v945, %v988
      %v1017 = vmul.f32 %v946, %v988
      %v1018 = vmul.f32 %v947, %v988
      %v1019 = vmul.f32 %v948, %v988
      %v1020 = vmul.f32 %v949, %v988
      %v1021 = vmul.f32 %v950, %v988
      %v1022 = vmul.f32 %v951, %v988
      %v1023 = vmul.f32 %v952, %v988
      %v1024 = vmul.f32 %v953, %v988
      %v1025 = vmul.f32 %v954, %v988
      %v1026 = vmul.f32 %v955, %v988
      %v1027 = vmul.f32 %v956, %v988
      %v1028 = vmul.f32 %v957, %v988
      %v1029 = vmul.f32 %v958, %v988
      %v1030 = vmul.f32 %v959, %v988
      %v1031 = vmul.f32 %v960, %v988
      %v1032 = vmul.f32 %v961, %v988
      %v1033 = vmul.f32 %v962, %v988
      %v1034 = vmul.f32 %v963, %v988
      %v1035 = vmul.f32 %v964, %v988
      %v1036 = vmul.f32 %v965, %v988
      %v1037 = vmul.f32 %v966, %v988
      %v1038 = vmul.f32 %v967, %v988
      %v1039 = vmul.f32 %v968, %v988
      %v1040 = vmul.f32 %v969, %v988
      %v1041 = vmul.f32 %v970, %v988
      %v1042 = vmul.f32 %v971, %v988
      %v1043 = vmul.f32 %v972, %v988
      %v1044 = vmul.f32 %v973, %v988
      %v1045 = vmul.f32 %v974, %v988
      %v1046 = vmul.f32 %v975, %v988
      %v1047 = vmul.f32 %v976, %v988
      %v1048 = vmul.f32 %v977, %v988
      %v1049 = vmul.f32 %v978, %v988
      %v1050 = vmul.f32 %v979, %v988
      %v1051 = vmul.f32 %v980, %v988
      %v1052 = vmul.f32 %v981, %v988
      %v1053 = vmul.f32 %v982, %v988
      %v1054 = vld [vmem:[%s3] sm:$0x1]
      %v1056 = vlaneseq
      %v1057 = vshrl.u32 %v1056, 7
      %v1058 = vsub.s32 0, %v1057
      %v1059 = vrot.slane %v1054, %v1058
      %v1061 = vadd.f32 %v990, %v1059
      %v1062 = vadd.f32 %v991, %v1059
      %v1063 = vadd.f32 %v992, %v1059
      %v1064 = vadd.f32 %v993, %v1059
      %v1065 = vadd.f32 %v994, %v1059
      %v1066 = vadd.f32 %v995, %v1059
      %v1067 = vadd.f32 %v996, %v1059
      %v1068 = vadd.f32 %v997, %v1059
      %v1069 = vadd.f32 %v998, %v1059
      %v1070 = vadd.f32 %v999, %v1059
      %v1071 = vadd.f32 %v1000, %v1059
      %v1072 = vadd.f32 %v1001, %v1059
      %v1073 = vadd.f32 %v1002, %v1059
      %v1074 = vadd.f32 %v1003, %v1059
      %v1075 = vadd.f32 %v1004, %v1059
      %v1076 = vadd.f32 %v1005, %v1059
      %v1077 = vadd.f32 %v1006, %v1059
      %v1078 = vadd.f32 %v1007, %v1059
      %v1079 = vadd.f32 %v1008, %v1059
      %v1080 = vadd.f32 %v1009, %v1059
      %v1081 = vadd.f32 %v1010, %v1059
      %v1082 = vadd.f32 %v1011, %v1059
      %v1083 = vadd.f32 %v1012, %v1059
      %v1084 = vadd.f32 %v1013, %v1059
      %v1085 = vadd.f32 %v1014, %v1059
      %v1086 = vadd.f32 %v1015, %v1059
      %v1087 = vadd.f32 %v1016, %v1059
      %v1088 = vadd.f32 %v1017, %v1059
      %v1089 = vadd.f32 %v1018, %v1059
      %v1090 = vadd.f32 %v1019, %v1059
      %v1091 = vadd.f32 %v1020, %v1059
      %v1092 = vadd.f32 %v1021, %v1059
      %v1093 = vadd.f32 %v1022, %v1059
      %v1094 = vadd.f32 %v1023, %v1059
      %v1095 = vadd.f32 %v1024, %v1059
      %v1096 = vadd.f32 %v1025, %v1059
      %v1097 = vadd.f32 %v1026, %v1059
      %v1098 = vadd.f32 %v1027, %v1059
      %v1099 = vadd.f32 %v1028, %v1059
      %v1100 = vadd.f32 %v1029, %v1059
      %v1101 = vadd.f32 %v1030, %v1059
      %v1102 = vadd.f32 %v1031, %v1059
      %v1103 = vadd.f32 %v1032, %v1059
      %v1104 = vadd.f32 %v1033, %v1059
      %v1105 = vadd.f32 %v1034, %v1059
      %v1106 = vadd.f32 %v1035, %v1059
      %v1107 = vadd.f32 %v1036, %v1059
      %v1108 = vadd.f32 %v1037, %v1059
      %v1109 = vadd.f32 %v1038, %v1059
      %v1110 = vadd.f32 %v1039, %v1059
      %v1111 = vadd.f32 %v1040, %v1059
      %v1112 = vadd.f32 %v1041, %v1059
      %v1113 = vadd.f32 %v1042, %v1059
      %v1114 = vadd.f32 %v1043, %v1059
      %v1115 = vadd.f32 %v1044, %v1059
      %v1116 = vadd.f32 %v1045, %v1059
      %v1117 = vadd.f32 %v1046, %v1059
      %v1118 = vadd.f32 %v1047, %v1059
      %v1119 = vadd.f32 %v1048, %v1059
      %v1120 = vadd.f32 %v1049, %v1059
      %v1121 = vadd.f32 %v1050, %v1059
      %v1122 = vadd.f32 %v1051, %v1059
      %v1123 = vadd.f32 %v1052, %v1059
      %v1124 = vadd.f32 %v1053, %v1059
      %v1125 = vmax.f32 %v1061, 0.0
      %v1126 = vmax.f32 %v1062, 0.0
      %v1127 = vmax.f32 %v1063, 0.0
      %v1128 = vmax.f32 %v1064, 0.0
      %v1129 = vmax.f32 %v1065, 0.0
      %v1130 = vmax.f32 %v1066, 0.0
      %v1131 = vmax.f32 %v1067, 0.0
      %v1132 = vmax.f32 %v1068, 0.0
      %v1133 = vmax.f32 %v1069, 0.0
      %v1134 = vmax.f32 %v1070, 0.0
      %v1135 = vmax.f32 %v1071, 0.0
      %v1136 = vmax.f32 %v1072, 0.0
      %v1137 = vmax.f32 %v1073, 0.0
      %v1138 = vmax.f32 %v1074, 0.0
      %v1139 = vmax.f32 %v1075, 0.0
      %v1140 = vmax.f32 %v1076, 0.0
      %v1141 = vmax.f32 %v1077, 0.0
      %v1142 = vmax.f32 %v1078, 0.0
      %v1143 = vmax.f32 %v1079, 0.0
      %v1144 = vmax.f32 %v1080, 0.0
      %v1145 = vmax.f32 %v1081, 0.0
      %v1146 = vmax.f32 %v1082, 0.0
      %v1147 = vmax.f32 %v1083, 0.0
      %v1148 = vmax.f32 %v1084, 0.0
      %v1149 = vmax.f32 %v1085, 0.0
      %v1150 = vmax.f32 %v1086, 0.0
      %v1151 = vmax.f32 %v1087, 0.0
      %v1152 = vmax.f32 %v1088, 0.0
      %v1153 = vmax.f32 %v1089, 0.0
      %v1154 = vmax.f32 %v1090, 0.0
      %v1155 = vmax.f32 %v1091, 0.0
      %v1156 = vmax.f32 %v1092, 0.0
      %v1157 = vmax.f32 %v1093, 0.0
      %v1158 = vmax.f32 %v1094, 0.0
      %v1159 = vmax.f32 %v1095, 0.0
      %v1160 = vmax.f32 %v1096, 0.0
      %v1161 = vmax.f32 %v1097, 0.0
      %v1162 = vmax.f32 %v1098, 0.0
      %v1163 = vmax.f32 %v1099, 0.0
      %v1164 = vmax.f32 %v1100, 0.0
      %v1165 = vmax.f32 %v1101, 0.0
      %v1166 = vmax.f32 %v1102, 0.0
      %v1167 = vmax.f32 %v1103, 0.0
      %v1168 = vmax.f32 %v1104, 0.0
      %v1169 = vmax.f32 %v1105, 0.0
      %v1170 = vmax.f32 %v1106, 0.0
      %v1171 = vmax.f32 %v1107, 0.0
      %v1172 = vmax.f32 %v1108, 0.0
      %v1173 = vmax.f32 %v1109, 0.0
      %v1174 = vmax.f32 %v1110, 0.0
      %v1175 = vmax.f32 %v1111, 0.0
      %v1176 = vmax.f32 %v1112, 0.0
      %v1177 = vmax.f32 %v1113, 0.0
      %v1178 = vmax.f32 %v1114, 0.0
      %v1179 = vmax.f32 %v1115, 0.0
      %v1180 = vmax.f32 %v1116, 0.0
      %v1181 = vmax.f32 %v1117, 0.0
      %v1182 = vmax.f32 %v1118, 0.0
      %v1183 = vmax.f32 %v1119, 0.0
      %v1184 = vmax.f32 %v1120, 0.0
      %v1185 = vmax.f32 %v1121, 0.0
      %v1186 = vmax.f32 %v1122, 0.0
      %v1187 = vmax.f32 %v1123, 0.0
      %v1188 = vmax.f32 %v1124, 0.0
      %v1189 = vpack.c.bf16 %v1126, %v1125
      %v1190 = vpack.c.bf16 %v1128, %v1127
      %v1191 = vpack.c.bf16 %v1130, %v1129
      %v1192 = vpack.c.bf16 %v1132, %v1131
      %v1193 = vpack.c.bf16 %v1134, %v1133
      %v1194 = vpack.c.bf16 %v1136, %v1135
      %v1195 = vpack.c.bf16 %v1138, %v1137
      %v1196 = vpack.c.bf16 %v1140, %v1139
      %v1197 = vpack.c.bf16 %v1142, %v1141
      %v1198 = vpack.c.bf16 %v1144, %v1143
      %v1199 = vpack.c.bf16 %v1146, %v1145
      %v1200 = vpack.c.bf16 %v1148, %v1147
      %v1201 = vpack.c.bf16 %v1150, %v1149
      %v1202 = vpack.c.bf16 %v1152, %v1151
      %v1203 = vpack.c.bf16 %v1154, %v1153
      %v1204 = vpack.c.bf16 %v1156, %v1155
      %v1205 = vpack.c.bf16 %v1158, %v1157
      %v1206 = vpack.c.bf16 %v1160, %v1159
      %v1207 = vpack.c.bf16 %v1162, %v1161
      %v1208 = vpack.c.bf16 %v1164, %v1163
      %v1209 = vpack.c.bf16 %v1166, %v1165
      %v1210 = vpack.c.bf16 %v1168, %v1167
      %v1211 = vpack.c.bf16 %v1170, %v1169
      %v1212 = vpack.c.bf16 %v1172, %v1171
      %v1213 = vpack.c.bf16 %v1174, %v1173
      %v1214 = vpack.c.bf16 %v1176, %v1175
      %v1215 = vpack.c.bf16 %v1178, %v1177
      %v1216 = vpack.c.bf16 %v1180, %v1179
      %v1217 = vpack.c.bf16 %v1182, %v1181
      %v1218 = vpack.c.bf16 %v1184, %v1183
      %v1219 = vpack.c.bf16 %v1186, %v1185
      %v1220 = vpack.c.bf16 %v1188, %v1187
      %v1253 = vunpack.c.l.b16 %v1189
      %v1254 = vunpack.c.h.b16 %v1189
      %v1255 = vunpack.c.l.b16 %v1190
      %v1256 = vunpack.c.h.b16 %v1190
      %v1257 = vunpack.c.l.b16 %v1191
      %v1258 = vunpack.c.h.b16 %v1191
      %v1259 = vunpack.c.l.b16 %v1192
      %v1260 = vunpack.c.h.b16 %v1192
      %v1261 = vunpack.c.l.b16 %v1193
      %v1262 = vunpack.c.h.b16 %v1193
      %v1263 = vunpack.c.l.b16 %v1194
      %v1264 = vunpack.c.h.b16 %v1194
      %v1265 = vunpack.c.l.b16 %v1195
      %v1266 = vunpack.c.h.b16 %v1195
      %v1267 = vunpack.c.l.b16 %v1196
      %v1268 = vunpack.c.h.b16 %v1196
      %v1269 = vunpack.c.l.b16 %v1197
      %v1270 = vunpack.c.h.b16 %v1197
      %v1271 = vunpack.c.l.b16 %v1198
      %v1272 = vunpack.c.h.b16 %v1198
      %v1273 = vunpack.c.l.b16 %v1199
      %v1274 = vunpack.c.h.b16 %v1199
      %v1275 = vunpack.c.l.b16 %v1200
      %v1276 = vunpack.c.h.b16 %v1200
      %v1277 = vunpack.c.l.b16 %v1201
      %v1278 = vunpack.c.h.b16 %v1201
      %v1279 = vunpack.c.l.b16 %v1202
      %v1280 = vunpack.c.h.b16 %v1202
      %v1281 = vunpack.c.l.b16 %v1203
      %v1282 = vunpack.c.h.b16 %v1203
      %v1283 = vunpack.c.l.b16 %v1204
      %v1284 = vunpack.c.h.b16 %v1204
      %v1285 = vunpack.c.l.b16 %v1205
      %v1286 = vunpack.c.h.b16 %v1205
      %v1287 = vunpack.c.l.b16 %v1206
      %v1288 = vunpack.c.h.b16 %v1206
      %v1289 = vunpack.c.l.b16 %v1207
      %v1290 = vunpack.c.h.b16 %v1207
      %v1291 = vunpack.c.l.b16 %v1208
      %v1292 = vunpack.c.h.b16 %v1208
      %v1293 = vunpack.c.l.b16 %v1209
      %v1294 = vunpack.c.h.b16 %v1209
      %v1295 = vunpack.c.l.b16 %v1210
      %v1296 = vunpack.c.h.b16 %v1210
      %v1297 = vunpack.c.l.b16 %v1211
      %v1298 = vunpack.c.h.b16 %v1211
      %v1299 = vunpack.c.l.b16 %v1212
      %v1300 = vunpack.c.h.b16 %v1212
      %v1301 = vunpack.c.l.b16 %v1213
      %v1302 = vunpack.c.h.b16 %v1213
      %v1303 = vunpack.c.l.b16 %v1214
      %v1304 = vunpack.c.h.b16 %v1214
      %v1305 = vunpack.c.l.b16 %v1215
      %v1306 = vunpack.c.h.b16 %v1215
      %v1307 = vunpack.c.l.b16 %v1216
      %v1308 = vunpack.c.h.b16 %v1216
      %v1309 = vunpack.c.l.b16 %v1217
      %v1310 = vunpack.c.h.b16 %v1217
      %v1311 = vunpack.c.l.b16 %v1218
      %v1312 = vunpack.c.h.b16 %v1218
      %v1313 = vunpack.c.l.b16 %v1219
      %v1314 = vunpack.c.h.b16 %v1219
      %v1315 = vunpack.c.l.b16 %v1220
      %v1316 = vunpack.c.h.b16 %v1220
      %v1317 = vpack.c.b16 %v1253, %v1253
      %v1318 = vpack.c.b16 %v1254, %v1254
      %v1319 = vpack.c.b16 %v1255, %v1255
      %v1320 = vpack.c.b16 %v1256, %v1256
      %v1321 = vpack.c.b16 %v1257, %v1257
      %v1322 = vpack.c.b16 %v1258, %v1258
      %v1323 = vpack.c.b16 %v1259, %v1259
      %v1324 = vpack.c.b16 %v1260, %v1260
      %v1325 = vpack.c.b16 %v1261, %v1261
      %v1326 = vpack.c.b16 %v1262, %v1262
      %v1327 = vpack.c.b16 %v1263, %v1263
      %v1328 = vpack.c.b16 %v1264, %v1264
      %v1329 = vpack.c.b16 %v1265, %v1265
      %v1330 = vpack.c.b16 %v1266, %v1266
      %v1331 = vpack.c.b16 %v1267, %v1267
      %v1332 = vpack.c.b16 %v1268, %v1268
      %v1333 = vpack.c.b16 %v1269, %v1269
      %v1334 = vpack.c.b16 %v1270, %v1270
      %v1335 = vpack.c.b16 %v1271, %v1271
      %v1336 = vpack.c.b16 %v1272, %v1272
      %v1337 = vpack.c.b16 %v1273, %v1273
      %v1338 = vpack.c.b16 %v1274, %v1274
      %v1339 = vpack.c.b16 %v1275, %v1275
      %v1340 = vpack.c.b16 %v1276, %v1276
      %v1341 = vpack.c.b16 %v1277, %v1277
      %v1342 = vpack.c.b16 %v1278, %v1278
      %v1343 = vpack.c.b16 %v1279, %v1279
      %v1344 = vpack.c.b16 %v1280, %v1280
      %v1345 = vpack.c.b16 %v1281, %v1281
      %v1346 = vpack.c.b16 %v1282, %v1282
      %v1347 = vpack.c.b16 %v1283, %v1283
      %v1348 = vpack.c.b16 %v1284, %v1284
      %v1349 = vpack.c.b16 %v1285, %v1285
      %v1350 = vpack.c.b16 %v1286, %v1286
      %v1351 = vpack.c.b16 %v1287, %v1287
      %v1352 = vpack.c.b16 %v1288, %v1288
      %v1353 = vpack.c.b16 %v1289, %v1289
      %v1354 = vpack.c.b16 %v1290, %v1290
      %v1355 = vpack.c.b16 %v1291, %v1291
      %v1356 = vpack.c.b16 %v1292, %v1292
      %v1357 = vpack.c.b16 %v1293, %v1293
      %v1358 = vpack.c.b16 %v1294, %v1294
      %v1359 = vpack.c.b16 %v1295, %v1295
      %v1360 = vpack.c.b16 %v1296, %v1296
      %v1361 = vpack.c.b16 %v1297, %v1297
      %v1362 = vpack.c.b16 %v1298, %v1298
      %v1363 = vpack.c.b16 %v1299, %v1299
      %v1364 = vpack.c.b16 %v1300, %v1300
      %v1365 = vpack.c.b16 %v1301, %v1301
      %v1366 = vpack.c.b16 %v1302, %v1302
      %v1367 = vpack.c.b16 %v1303, %v1303
      %v1368 = vpack.c.b16 %v1304, %v1304
      %v1369 = vpack.c.b16 %v1305, %v1305
      %v1370 = vpack.c.b16 %v1306, %v1306
      %v1371 = vpack.c.b16 %v1307, %v1307
      %v1372 = vpack.c.b16 %v1308, %v1308
      %v1373 = vpack.c.b16 %v1309, %v1309
      %v1374 = vpack.c.b16 %v1310, %v1310
      %v1375 = vpack.c.b16 %v1311, %v1311
      %v1376 = vpack.c.b16 %v1312, %v1312
      %v1377 = vpack.c.b16 %v1313, %v1313
      %v1378 = vpack.c.b16 %v1314, %v1314
      %v1379 = vpack.c.b16 %v1315, %v1315
      %v1380 = vpack.c.b16 %v1316, %v1316
      %1445 = vst [vmem:[#allocation8] sm:$0xf] %v1317
      %1446 = vst [vmem:[#allocation8 + $0x4] sm:$0xf] %v1318
      %1447 = vst [vmem:[#allocation8 + $0x8] sm:$0xf] %v1319
      %1448 = vst [vmem:[#allocation8 + $0xc] sm:$0xf] %v1320
      %1449 = vst [vmem:[#allocation8 + $0x10] sm:$0xf] %v1321
      %1450 = vst [vmem:[#allocation8 + $0x14] sm:$0xf] %v1322
      %1451 = vst [vmem:[#allocation8 + $0x18] sm:$0xf] %v1323
      %1452 = vst [vmem:[#allocation8 + $0x1c] sm:$0xf] %v1324
      %1453 = vst [vmem:[#allocation8 + $0x20] sm:$0xf] %v1325
      %1454 = vst [vmem:[#allocation8 + $0x24] sm:$0xf] %v1326
      %1455 = vst [vmem:[#allocation8 + $0x28] sm:$0xf] %v1327
      %1456 = vst [vmem:[#allocation8 + $0x2c] sm:$0xf] %v1328
      %1457 = vst [vmem:[#allocation8 + $0x30] sm:$0xf] %v1329
      %1458 = vst [vmem:[#allocation8 + $0x34] sm:$0xf] %v1330
      %1459 = vst [vmem:[#allocation8 + $0x38] sm:$0xf] %v1331
      %1460 = vst [vmem:[#allocation8 + $0x3c] sm:$0xf] %v1332
      %1461 = vst [vmem:[#allocation8 + $0x40] sm:$0xf] %v1333
      %1462 = vst [vmem:[#allocation8 + $0x44] sm:$0xf] %v1334
      %1463 = vst [vmem:[#allocation8 + $0x48] sm:$0xf] %v1335
      %1464 = vst [vmem:[#allocation8 + $0x4c] sm:$0xf] %v1336
      %1465 = vst [vmem:[#allocation8 + $0x50] sm:$0xf] %v1337
      %1466 = vst [vmem:[#allocation8 + $0x54] sm:$0xf] %v1338
      %1467 = vst [vmem:[#allocation8 + $0x58] sm:$0xf] %v1339
      %1468 = vst [vmem:[#allocation8 + $0x5c] sm:$0xf] %v1340
      %1469 = vst [vmem:[#allocation8 + $0x60] sm:$0xf] %v1341
      %1470 = vst [vmem:[#allocation8 + $0x64] sm:$0xf] %v1342
      %1471 = vst [vmem:[#allocation8 + $0x68] sm:$0xf] %v1343
      %1472 = vst [vmem:[#allocation8 + $0x6c] sm:$0xf] %v1344
      %1473 = vst [vmem:[#allocation8 + $0x70] sm:$0xf] %v1345
      %1474 = vst [vmem:[#allocation8 + $0x74] sm:$0xf] %v1346
      %1475 = vst [vmem:[#allocation8 + $0x78] sm:$0xf] %v1347
      %1476 = vst [vmem:[#allocation8 + $0x7c] sm:$0xf] %v1348
      %1477 = vst [vmem:[#allocation8 + $0x80] sm:$0xf] %v1349
      %1478 = vst [vmem:[#allocation8 + $0x84] sm:$0xf] %v1350
      %1479 = vst [vmem:[#allocation8 + $0x88] sm:$0xf] %v1351
      %1480 = vst [vmem:[#allocation8 + $0x8c] sm:$0xf] %v1352
      %1481 = vst [vmem:[#allocation8 + $0x90] sm:$0xf] %v1353
      %1482 = vst [vmem:[#allocation8 + $0x94] sm:$0xf] %v1354
      %1483 = vst [vmem:[#allocation8 + $0x98] sm:$0xf] %v1355
      %1484 = vst [vmem:[#allocation8 + $0x9c] sm:$0xf] %v1356
      %1485 = vst [vmem:[#allocation8 + $0xa0] sm:$0xf] %v1357
      %1486 = vst [vmem:[#allocation8 + $0xa4] sm:$0xf] %v1358
      %1487 = vst [vmem:[#allocation8 + $0xa8] sm:$0xf] %v1359
      %1488 = vst [vmem:[#allocation8 + $0xac] sm:$0xf] %v1360
      %1489 = vst [vmem:[#allocation8 + $0xb0] sm:$0xf] %v1361
      %1490 = vst [vmem:[#allocation8 + $0xb4] sm:$0xf] %v1362
      %1491 = vst [vmem:[#allocation8 + $0xb8] sm:$0xf] %v1363
      %1492 = vst [vmem:[#allocation8 + $0xbc] sm:$0xf] %v1364
      %1493 = vst [vmem:[#allocation8 + $0xc0] sm:$0xf] %v1365
      %1494 = vst [vmem:[#allocation8 + $0xc4] sm:$0xf] %v1366
      %1495 = vst [vmem:[#allocation8 + $0xc8] sm:$0xf] %v1367
      %1496 = vst [vmem:[#allocation8 + $0xcc] sm:$0xf] %v1368
      %1497 = vst [vmem:[#allocation8 + $0xd0] sm:$0xf] %v1369
      %1498 = vst [vmem:[#allocation8 + $0xd4] sm:$0xf] %v1370
      %1499 = vst [vmem:[#allocation8 + $0xd8] sm:$0xf] %v1371
      %1500 = vst [vmem:[#allocation8 + $0xdc] sm:$0xf] %v1372
      %1501 = vst [vmem:[#allocation8 + $0xe0] sm:$0xf] %v1373
      %1502 = vst [vmem:[#allocation8 + $0xe4] sm:$0xf] %v1374
      %1503 = vst [vmem:[#allocation8 + $0xe8] sm:$0xf] %v1375
      %1504 = vst [vmem:[#allocation8 + $0xec] sm:$0xf] %v1376
      %1505 = vst [vmem:[#allocation8 + $0xf0] sm:$0xf] %v1377
      %1506 = vst [vmem:[#allocation8 + $0xf4] sm:$0xf] %v1378
      %1507 = vst [vmem:[#allocation8 + $0xf8] sm:$0xf] %v1379
      %1508 = vst [vmem:[#allocation8 + $0xfc] sm:$0xf] %v1380
    $region33: #{tpu_custom_call.1} parent=1 // pred_fallthru
      _
    // Predicated region
    $region34: #{tpu_custom_call.1} parent=1 // pred_check
      _
    $region35: #{tpu_custom_call.1} parent=1 // pred_check_branch
      %1510 = sbr.rel (0) target = $region37
    $region36: #{tpu_custom_call.1} parent=1 // pred_region
      %s1512 = ssub.s32 4096, 4096
      %1513 = vsyncadd [#allocation5], %s1512
      %s1514 = sshll.u32 [#allocation8], 4
      %s1515 = int_to_ptr.vmem [resolvable:$true] %s1514
      %1520 = dma.vmem_to_hbm [thread:$0]  %s1515, 4096, %s4, [#allocation5], 64, 64, 4
    $region37: #{tpu_custom_call.1} parent=1 // pred_fallthru
      _
    // Predicated region
    $region38: #{tpu_custom_call.1} parent=1 // pred_check
      _
    $region39: #{tpu_custom_call.1} parent=1 // pred_check_branch
      %1522 = sbr.rel (0) target = $region41
    $region40: #{tpu_custom_call.1} parent=1 // pred_region
      %1523 = dma.done [#allocation5], 4096
    $region41: #{tpu_custom_call.1} parent=1 // pred_fallthru
      _
    %1524 = vsyncpa [#allocation4], 1
    %1525 = vsyncpa [#allocation7], 1
    %1526 = vsyncpa [#allocation5], 1

</llo_original>
